<compile_context>
chip_gen: v6e
topology: v6e:2x2x1
jax: 0.10.0
libtpu: 0.0.40
codegen_flags: <defaults>
</compile_context>

<pallas_src>
import functools

import jax
import jax.numpy as jnp
from jax.experimental import pallas as pl
from jax.experimental.pallas import tpu as pltpu

_LANE = 128      # vreg lane width
_SUBLANE = 8     # f32 sublane count


def _round_up(v, m):
    return (v + m - 1) // m * m


def _default_act_dtype(use_bf16):
    """bf16 activations (tanh) on chips with a bf16 EUP (v6e/v7x); f32 on v5e."""
    if not use_bf16:
        return jnp.float32
    try:
        kind = jax.devices()[0].device_kind.lower()
    except Exception:
        return jnp.bfloat16
    if "v5" in kind and ("lite" in kind or "v5e" in kind):
        return jnp.float32       # v5e: no bf16 EUP/VPU, keep f32 activations
    return jnp.bfloat16


def _mlp_kernel(*refs, num_layers, act_dtype):
    """Fused MLP on one row tile: (Linear -> Tanh) x (L-1) -> Linear.

    refs = (x_ref, w0, b0, w1, b1, ..., o_ref).  x arrives un-padded f32; the
    bf16 cast for the MXU happens in VMEM (no wrapper pad/cast HBM pass).
    """
    x_ref, o_ref = refs[0], refs[-1]
    wb = refs[1:-1]
    h = x_ref[...]
    for i in range(num_layers):
        w_ref = wb[2 * i]
        b_ref = wb[2 * i + 1]
        # MXU matmul with f32 accumulation; bias add stays f32 on the VPU.
        h = jnp.dot(h.astype(w_ref.dtype), w_ref[...],
                    preferred_element_type=jnp.float32) + b_ref[...]
        if i != num_layers - 1:
            # EUP tanh; bf16 on v6e/v7x (next MXU matmul needs bf16 anyway),
            # f32 on v5e.
            h = jnp.tanh(h.astype(act_dtype))
    o_ref[...] = h.astype(o_ref.dtype)


def decoder_reference(x, params, compute_dtype=jnp.float32,
                      act_dtype=jnp.float32):
    """Pure-JAX reference (optionally mimicking the bf16 MXU/EUP paths)."""
    h = x
    for i, (w, b) in enumerate(params):
        h = jnp.dot(h.astype(compute_dtype), w.astype(compute_dtype),
                    preferred_element_type=jnp.float32) + b.reshape(1, -1)
        if i != len(params) - 1:
            h = jnp.tanh(h.astype(act_dtype)).astype(jnp.float32)
    return h.astype(jnp.float32)


def decoder_forward(x, adj, params, *, row_tile=None, use_bf16=True,
                    act_dtype=None, min_pallas_rows=1024):
    """Pallas implementation of Decoder.forward(x, adj).

    x:      (N, input_dim) float32 node features
    adj:    ignored (the reference forward never uses it)
    params: list of (W, b) with W shaped (in, out) and b shaped (1, out)
    """
    del adj  # the reference forward ignores adj
    n, d_in = x.shape
    num_layers = len(params)
    d_out = params[-1][0].shape[1]

    if n < min_pallas_rows:
        # A handful of vregs of work: kernel launch + pipeline prologue
        # dominate; plain XLA fusion of a few tiny matmuls wins.
        return decoder_reference(x, params)

    if act_dtype is None:
        act_dtype = _default_act_dtype(use_bf16)
    mxu_dtype = jnp.bfloat16 if use_bf16 else jnp.float32

    # ---- row tile: large, 128-aligned; >=4 grid steps for medium N --------
    if row_tile is None:
        if n <= 4096:
            # >=4 grid steps so each of v7x's two TensorCores gets >=2 steps
            # and the double-buffer pipeline has something to overlap.
            row_tile = max(_LANE, _round_up(pl.cdiv(n, 4), _LANE))
        else:
            row_tile = 1024
    row_tile = max(_SUBLANE, _round_up(row_tile, _SUBLANE))
    grid = (pl.cdiv(n, row_tile),)   # ragged last block: Pallas masks stores

    # ---- dims: keep K of layer 0 at d_in, pad hidden widths to 128 lanes,
    #      keep the final width at d_out (narrow output store, no slice pass).
    dims = [d_in] + [w.shape[1] for (w, _) in params]
    pdims = [d_in] + [_round_up(d, _LANE) for d in dims[1:-1]] + [d_out]

    flat_wb = []
    in_specs = [pl.BlockSpec((row_tile, d_in), lambda i: (i, 0))]
    for li, (w, b) in enumerate(params):
        w_p = jnp.pad(w, ((0, pdims[li] - w.shape[0]),
                          (0, pdims[li + 1] - w.shape[1]))).astype(mxu_dtype)
        b2 = b.reshape(1, -1).astype(jnp.float32)
        b_p = jnp.pad(b2, ((0, 0), (0, pdims[li + 1] - b2.shape[1])))
        flat_wb += [w_p, b_p]
        # Constant-index blocks: DMA'd once, resident across the whole grid.
        in_specs += [pl.BlockSpec(w_p.shape, lambda i: (0, 0)),
                     pl.BlockSpec(b_p.shape, lambda i: (0, 0))]

    out_spec = pl.BlockSpec((row_tile, d_out), lambda i: (i, 0))
    out_shape = jax.ShapeDtypeStruct((n, d_out), x.dtype)

    # ---- advisory cost estimate (raw I/O bytes: no wrapper pad / slice) ----
    flops = 2 * n * sum(pdims[i] * pdims[i + 1] for i in range(num_layers))
    transcendentals = n * sum(pdims[i + 1] for i in range(num_layers - 1))
    bytes_accessed = (x.size * x.dtype.itemsize
                      + sum(a.size * a.dtype.itemsize for a in flat_wb)
                      + n * d_out * jnp.dtype(x.dtype).itemsize)
    cost = pl.CostEstimate(flops=int(flops),
                           transcendentals=int(transcendentals),
                           bytes_accessed=int(bytes_accessed))

    out = pl.pallas_call(
        functools.partial(_mlp_kernel, num_layers=num_layers,
                          act_dtype=act_dtype),
        out_shape=out_shape,
        grid_spec=pltpu.PrefetchScalarGridSpec(
            num_scalar_prefetch=0,
            grid=grid,
            in_specs=in_specs,
            out_specs=out_spec,
        ),
        compiler_params=pltpu.CompilerParams(
            dimension_semantics=("parallel",)),
        cost_estimate=cost,
    )(x, *flat_wb)

    return out


def init_decoder_params(key, input_dim, output_dim, mid_feature_dims):
    """Deterministic init matching nn.Linear shapes (W stored as (in, out))."""
    dims = [input_dim] + list(mid_feature_dims) + [output_dim]
    params = []
    for i in range(len(dims) - 1):
        key, kw, kb = jax.random.split(key, 3)
        fan_in, fan_out = dims[i], dims[i + 1]
        bound = 1.0 / jnp.sqrt(jnp.float32(fan_in))
        w = jax.random.uniform(kw, (fan_in, fan_out), jnp.float32,
                               minval=-bound, maxval=bound)
        b = jax.random.uniform(kb, (1, fan_out), jnp.float32,
                               minval=-bound, maxval=bound)
        params.append((w, b))
    return params


if __name__ == "__main__":
    # Shapes consistent with the module: Decoder(32, 16, [64, 48]).
    # N=2000 is deliberately NOT a multiple of the row tile (exercises the
    # ragged / masked last block) and gives a 4-step parallel grid
    # (>=2 steps per TensorCore on v7x).
    input_dim, output_dim = 32, 16
    mid_feature_dims = [64, 48]
    n_nodes = 2000

    key = jax.random.PRNGKey(0)
    key, kx, ka = jax.random.split(key, 3)
    x = jax.random.normal(kx, (n_nodes, input_dim), jnp.float32)
    adj = jax.random.normal(ka, (n_nodes, n_nodes), jnp.float32)  # unused

    params = init_decoder_params(key, input_dim, output_dim, mid_feature_dims)

    out = decoder_forward(x, adj, params)
    out = jax.block_until_ready(out)
    assert out.shape == (n_nodes, output_dim)
    assert out.dtype == jnp.float32

    # Tight check vs a reference mimicking the kernel arithmetic
    # (bf16 MXU inputs, f32 accumulation, same activation dtype).
    act_dtype = _default_act_dtype(True)
    ref_mx = decoder_reference(x, params, compute_dtype=jnp.bfloat16,
                               act_dtype=act_dtype)
    assert jnp.allclose(out, ref_mx, atol=2e-2, rtol=2e-2), \
        float(jnp.max(jnp.abs(out - ref_mx)))

    # Loose check vs the exact f32 PyTorch-equivalent forward.
    ref_f32 = decoder_reference(x, params)
    assert jnp.allclose(out, ref_f32, atol=5e-2, rtol=5e-2), \
        float(jnp.max(jnp.abs(out - ref_f32)))

    print("KERNEL_OK")
</pallas_src>

<mosaic_0001>
module attributes {stable_mosaic.version = 11 : i64} {
  func.func @_mlp_kernel(%arg0: i32, %arg1: memref<512x32xf32, #tpu.memory_space<vmem>>, %arg2: memref<32x128xbf16, #tpu.memory_space<vmem>>, %arg3: memref<1x128xf32, #tpu.memory_space<vmem>>, %arg4: memref<128x128xbf16, #tpu.memory_space<vmem>>, %arg5: memref<1x128xf32, #tpu.memory_space<vmem>>, %arg6: memref<128x16xbf16, #tpu.memory_space<vmem>>, %arg7: memref<1x16xf32, #tpu.memory_space<vmem>>, %arg8: memref<512x16xf32, #tpu.memory_space<vmem>>) attributes {dimension_semantics = [#tpu.dimension_semantics<parallel>], iteration_bounds = array<i64: 4>, scalar_prefetch = 0 : i64, scratch_operands = 0 : i64, tpu.core_type = #tpu.core_type<tc>, window_params = [{transform_indices = @transform_0, window_bounds = array<i64: 512, 32>}, {pipeline_mode = #tpu.pipeline_mode<synchronous>, transform_indices = @transform_1, window_bounds = array<i64: 32, 128>}, {pipeline_mode = #tpu.pipeline_mode<synchronous>, transform_indices = @transform_2, window_bounds = array<i64: 1, 128>}, {pipeline_mode = #tpu.pipeline_mode<synchronous>, transform_indices = @transform_3, window_bounds = array<i64: 128, 128>}, {pipeline_mode = #tpu.pipeline_mode<synchronous>, transform_indices = @transform_4, window_bounds = array<i64: 1, 128>}, {pipeline_mode = #tpu.pipeline_mode<synchronous>, transform_indices = @transform_5, window_bounds = array<i64: 128, 16>}, {pipeline_mode = #tpu.pipeline_mode<synchronous>, transform_indices = @transform_6, window_bounds = array<i64: 1, 16>}, {transform_indices = @transform_7, window_bounds = array<i64: 512, 16>}]} {
    %c0 = arith.constant 0 : index
    %c0_0 = arith.constant 0 : index
    %0 = vector.load %arg1[%c0, %c0_0] : memref<512x32xf32, #tpu.memory_space<vmem>>, vector<512x32xf32>
    %1 = arith.truncf %0 : vector<512x32xf32> to vector<512x32xbf16>
    %c0_1 = arith.constant 0 : index
    %c0_2 = arith.constant 0 : index
    %2 = vector.load %arg2[%c0_1, %c0_2] : memref<32x128xbf16, #tpu.memory_space<vmem>>, vector<32x128xbf16>
    %cst = arith.constant dense<0.000000e+00> : vector<512x128xf32>
    %3 = tpu.matmul %1, %2, %cst {dimension_numbers = #tpu.dot_dimension_numbers<[1], [0], [0], [1], [0, 0, 1, 1], [], []>} : vector<512x32xbf16>, vector<32x128xbf16>, vector<512x128xf32> -> vector<512x128xf32>
    %c0_3 = arith.constant 0 : index
    %c0_4 = arith.constant 0 : index
    %4 = vector.load %arg3[%c0_3, %c0_4] : memref<1x128xf32, #tpu.memory_space<vmem>>, vector<1x128xf32>
    %5 = vector.broadcast %4 : vector<1x128xf32> to vector<512x128xf32>
    %6 = arith.addf %3, %5 : vector<512x128xf32>
    %7 = arith.truncf %6 : vector<512x128xf32> to vector<512x128xbf16>
    %8 = math.tanh %7 : vector<512x128xbf16>
    %c0_5 = arith.constant 0 : index
    %c0_6 = arith.constant 0 : index
    %9 = vector.load %arg4[%c0_5, %c0_6] : memref<128x128xbf16, #tpu.memory_space<vmem>>, vector<128x128xbf16>
    %cst_7 = arith.constant dense<0.000000e+00> : vector<512x128xf32>
    %10 = tpu.matmul %8, %9, %cst_7 {dimension_numbers = #tpu.dot_dimension_numbers<[1], [0], [0], [1], [0, 0, 1, 1], [], []>} : vector<512x128xbf16>, vector<128x128xbf16>, vector<512x128xf32> -> vector<512x128xf32>
    %c0_8 = arith.constant 0 : index
    %c0_9 = arith.constant 0 : index
    %11 = vector.load %arg5[%c0_8, %c0_9] : memref<1x128xf32, #tpu.memory_space<vmem>>, vector<1x128xf32>
    %12 = vector.broadcast %11 : vector<1x128xf32> to vector<512x128xf32>
    %13 = arith.addf %10, %12 : vector<512x128xf32>
    %14 = arith.truncf %13 : vector<512x128xf32> to vector<512x128xbf16>
    %15 = math.tanh %14 : vector<512x128xbf16>
    %c0_10 = arith.constant 0 : index
    %c0_11 = arith.constant 0 : index
    %16 = vector.load %arg6[%c0_10, %c0_11] : memref<128x16xbf16, #tpu.memory_space<vmem>>, vector<128x16xbf16>
    %cst_12 = arith.constant dense<0.000000e+00> : vector<512x16xf32>
    %17 = tpu.matmul %15, %16, %cst_12 {dimension_numbers = #tpu.dot_dimension_numbers<[1], [0], [0], [1], [0, 0, 1, 1], [], []>} : vector<512x128xbf16>, vector<128x16xbf16>, vector<512x16xf32> -> vector<512x16xf32>
    %c0_13 = arith.constant 0 : index
    %c0_14 = arith.constant 0 : index
    %18 = vector.load %arg7[%c0_13, %c0_14] : memref<1x16xf32, #tpu.memory_space<vmem>>, vector<1x16xf32>
    %19 = vector.broadcast %18 : vector<1x16xf32> to vector<512x16xf32>
    %20 = arith.addf %17, %19 : vector<512x16xf32>
    %c0_15 = arith.constant 0 : index
    %c0_16 = arith.constant 0 : index
    %21 = vector.load %arg8[%c0_15, %c0_16] : memref<512x16xf32, #tpu.memory_space<vmem>>, vector<512x16xf32>
    tpu.vector_store %arg8[%c0_15, %c0_16], %20 {strides = array<i32>} : memref<512x16xf32, #tpu.memory_space<vmem>>, vector<512x16xf32>,
    return
  }
  func.func @transform_0(%arg0: i32) -> (i32, i32) {
    %c0_i32 = arith.constant 0 : i32
    %c0_i32_0 = arith.constant 0 : i32
    return %arg0, %c0_i32 : i32, i32
  }
  func.func @transform_1(%arg0: i32) -> (i32, i32) {
    %c0_i32 = arith.constant 0 : i32
    %c0_i32_0 = arith.constant 0 : i32
    %c0_i32_1 = arith.constant 0 : i32
    return %c0_i32, %c0_i32_0 : i32, i32
  }
  func.func @transform_2(%arg0: i32) -> (i32, i32) {
    %c0_i32 = arith.constant 0 : i32
    %c0_i32_0 = arith.constant 0 : i32
    %c0_i32_1 = arith.constant 0 : i32
    return %c0_i32, %c0_i32_0 : i32, i32
  }
  func.func @transform_3(%arg0: i32) -> (i32, i32) {
    %c0_i32 = arith.constant 0 : i32
    %c0_i32_0 = arith.constant 0 : i32
    %c0_i32_1 = arith.constant 0 : i32
    return %c0_i32, %c0_i32_0 : i32, i32
  }
  func.func @transform_4(%arg0: i32) -> (i32, i32) {
    %c0_i32 = arith.constant 0 : i32
    %c0_i32_0 = arith.constant 0 : i32
    %c0_i32_1 = arith.constant 0 : i32
    return %c0_i32, %c0_i32_0 : i32, i32
  }
  func.func @transform_5(%arg0: i32) -> (i32, i32) {
    %c0_i32 = arith.constant 0 : i32
    %c0_i32_0 = arith.constant 0 : i32
    %c0_i32_1 = arith.constant 0 : i32
    return %c0_i32, %c0_i32_0 : i32, i32
  }
  func.func @transform_6(%arg0: i32) -> (i32, i32) {
    %c0_i32 = arith.constant 0 : i32
    %c0_i32_0 = arith.constant 0 : i32
    %c0_i32_1 = arith.constant 0 : i32
    return %c0_i32, %c0_i32_0 : i32, i32
  }
  func.func @transform_7(%arg0: i32) -> (i32, i32) {
    %c0_i32 = arith.constant 0 : i32
    %c0_i32_0 = arith.constant 0 : i32
    return %arg0, %c0_i32 : i32, i32
  }
}

</mosaic_0001>

<llo_original>
// kernel: tpu_custom_call.1
$region0: #{tpu_custom_call.1}
  #allocation0 [shape = 'u32[]', space=smem, size = 0x4, offset = 0x4, fixed_abs, tag = 'smem constant byte address 0x4 - core index']
  #allocation1 [shape = 'u32[144,128]{1,0:T(1,128)}', space=vmem, size = 0x12000, scoped, tag = 'internal scratch']
  %s0 = inlined_call_operand.vmem [shape: f32[2000,32], index: 0, kind: input, shape index: {}]
  %s1 = inlined_call_operand.vmem [shape: bf16[32,128], index: 1, kind: input, shape index: {}]
  %s2 = inlined_call_operand.vmem [shape: f32[1,128], index: 2, kind: input, shape index: {}]
  %s3 = inlined_call_operand.vmem [shape: bf16[128,128], index: 3, kind: input, shape index: {}]
  %s4 = inlined_call_operand.vmem [shape: f32[1,128], index: 4, kind: input, shape index: {}]
  %s5 = inlined_call_operand.vmem [shape: bf16[128,16], index: 5, kind: input, shape index: {}]
  %s6 = inlined_call_operand.vmem [shape: f32[1,16], index: 6, kind: input, shape index: {}]
  %s7 = inlined_call_operand.vmem [shape: f32[2000,16], index: 7, kind: output, shape index: {}]
  %s8 = sld [smem:[#allocation0]]
  $region109: #{tpu_custom_call.1} parent=0
    _
  %s10 = ssub.s32 1, %s8
  %s11 = scalar_select 0, %s10, %s8
  $region1: #{tpu_custom_call.1} parent=0
    #allocation2 [shape = 'u8[524288]{0}', space=vmem, size = 0x80000, scoped, tag = 'output window, operand 0']
    loop: start=0, step=1, limit=6
    $region2: #{tpu_custom_call.1} parent=1 // loop_pre_header
      _
    $region3: #{tpu_custom_call.1} parent=1 // loop_header
      %s13 = sphi 0, %s17
      %p14 = scmp.ge.s32.totalorder %s13, 6
      %s23 = sphi 0, %s25
      %s26 = sphi 0, %s23
      %s27 = sphi 0, %s26
      %s43 = sphi 0, %s27
      %s47 = sphi 0, %s47
      %s49 = sphi 0, %s47
      %s50 = sphi 0, %s49
      %s64 = sphi 0, %s50
      %s68 = sphi 0, %s68
      %s70 = sphi 0, %s68
      %s71 = sphi 0, %s70
      %s85 = sphi 0, %s71
      %s89 = sphi 0, %s89
      %s91 = sphi 0, %s89
      %s92 = sphi 0, %s91
      %s106 = sphi 0, %s92
      %s110 = sphi 0, %s110
      %s112 = sphi 0, %s110
      %s113 = sphi 0, %s112
      %s127 = sphi 0, %s113
      %s131 = sphi 0, %s131
      %s133 = sphi 0, %s131
      %s134 = sphi 0, %s133
      %s148 = sphi 0, %s134
      %s152 = sphi 0, %s152
      %s154 = sphi 0, %s152
      %s155 = sphi 0, %s154
      %s169 = sphi 0, %s155
      %s175 = sphi 0, %s177
      %s178 = sphi 0, %s175
      %s179 = sphi 0, %s178
      %s195 = sphi 0, %s179
    $region4: #{tpu_custom_call.1} parent=1 // loop_header_branch
      %16 = sbr.rel (%p14) target = $region8
    $region5: #{tpu_custom_call.1} parent=1 // loop_body
      %s18 = ssub.s32 %s13, 1
      %s19 = ssub.s32 %s13, 2
      %s20 = sadd.s32 %s13, 1
      %s21 = ssub.s32 %s13, %s20
      %p22 = scmp.eq.s32.totalorder %s21, 0
      %s24 = sadd.s32 %s23, 1
      %s25 = scalar_select %p22, %s23, %s24
      %p28 = pneg %p22
      %p29 = scmp.eq.s32.totalorder %s13, 3
      %p30 = por %p28, %p29
      %p31 = scmp.ne.s32.totalorder %s23, %s26
      %p32 = scmp.eq.s32.totalorder %s13, 0
      %p33 = por %p31, %p32
      %p34 = scmp.ne.s32.totalorder %s23, %s26
      %p35 = scmp.eq.s32.totalorder %s18, 3
      %p36 = por %p34, %p35
      %p37 = scmp.ne.s32.totalorder %s26, %s27
      %p38 = scmp.eq.s32.totalorder %s18, 0
      %p39 = por %p37, %p38
      %p40 = scmp.ne.s32.totalorder %s26, %s27
      %p41 = scmp.eq.s32.totalorder %s19, 3
      %p42 = por %p40, %p41
      %p44 = scmp.ne.s32.totalorder %s27, %s43
      %p45 = scmp.eq.s32.totalorder %s19, 0
      %p46 = por %p44, %p45
      %s48 = sadd.s32 %s47, 1
      %p51 = scmp.eq.s32.totalorder %s13, 3
      %p52 = scmp.ne.s32.totalorder %s47, %s49
      %p53 = scmp.eq.s32.totalorder %s13, 0
      %p54 = por %p52, %p53
      %p55 = scmp.ne.s32.totalorder %s47, %s49
      %p56 = scmp.eq.s32.totalorder %s18, 3
      %p57 = por %p55, %p56
      %p58 = scmp.ne.s32.totalorder %s49, %s50
      %p59 = scmp.eq.s32.totalorder %s18, 0
      %p60 = por %p58, %p59
      %p61 = scmp.ne.s32.totalorder %s49, %s50
      %p62 = scmp.eq.s32.totalorder %s19, 3
      %p63 = por %p61, %p62
      %p65 = scmp.ne.s32.totalorder %s50, %s64
      %p66 = scmp.eq.s32.totalorder %s19, 0
      %p67 = por %p65, %p66
      %s69 = sadd.s32 %s68, 1
      %p72 = scmp.eq.s32.totalorder %s13, 3
      %p73 = scmp.ne.s32.totalorder %s68, %s70
      %p74 = scmp.eq.s32.totalorder %s13, 0
      %p75 = por %p73, %p74
      %p76 = scmp.ne.s32.totalorder %s68, %s70
      %p77 = scmp.eq.s32.totalorder %s18, 3
      %p78 = por %p76, %p77
      %p79 = scmp.ne.s32.totalorder %s70, %s71
      %p80 = scmp.eq.s32.totalorder %s18, 0
      %p81 = por %p79, %p80
      %p82 = scmp.ne.s32.totalorder %s70, %s71
      %p83 = scmp.eq.s32.totalorder %s19, 3
      %p84 = por %p82, %p83
      %p86 = scmp.ne.s32.totalorder %s71, %s85
      %p87 = scmp.eq.s32.totalorder %s19, 0
      %p88 = por %p86, %p87
      %s90 = sadd.s32 %s89, 1
      %p93 = scmp.eq.s32.totalorder %s13, 3
      %p94 = scmp.ne.s32.totalorder %s89, %s91
      %p95 = scmp.eq.s32.totalorder %s13, 0
      %p96 = por %p94, %p95
      %p97 = scmp.ne.s32.totalorder %s89, %s91
      %p98 = scmp.eq.s32.totalorder %s18, 3
      %p99 = por %p97, %p98
      %p100 = scmp.ne.s32.totalorder %s91, %s92
      %p101 = scmp.eq.s32.totalorder %s18, 0
      %p102 = por %p100, %p101
      %p103 = scmp.ne.s32.totalorder %s91, %s92
      %p104 = scmp.eq.s32.totalorder %s19, 3
      %p105 = por %p103, %p104
      %p107 = scmp.ne.s32.totalorder %s92, %s106
      %p108 = scmp.eq.s32.totalorder %s19, 0
      %p109 = por %p107, %p108
      %s111 = sadd.s32 %s110, 1
      %p114 = scmp.eq.s32.totalorder %s13, 3
      %p115 = scmp.ne.s32.totalorder %s110, %s112
      %p116 = scmp.eq.s32.totalorder %s13, 0
      %p117 = por %p115, %p116
      %p118 = scmp.ne.s32.totalorder %s110, %s112
      %p119 = scmp.eq.s32.totalorder %s18, 3
      %p120 = por %p118, %p119
      %p121 = scmp.ne.s32.totalorder %s112, %s113
      %p122 = scmp.eq.s32.totalorder %s18, 0
      %p123 = por %p121, %p122
      %p124 = scmp.ne.s32.totalorder %s112, %s113
      %p125 = scmp.eq.s32.totalorder %s19, 3
      %p126 = por %p124, %p125
      %p128 = scmp.ne.s32.totalorder %s113, %s127
      %p129 = scmp.eq.s32.totalorder %s19, 0
      %p130 = por %p128, %p129
      %s132 = sadd.s32 %s131, 1
      %p135 = scmp.eq.s32.totalorder %s13, 3
      %p136 = scmp.ne.s32.totalorder %s131, %s133
      %p137 = scmp.eq.s32.totalorder %s13, 0
      %p138 = por %p136, %p137
      %p139 = scmp.ne.s32.totalorder %s131, %s133
      %p140 = scmp.eq.s32.totalorder %s18, 3
      %p141 = por %p139, %p140
      %p142 = scmp.ne.s32.totalorder %s133, %s134
      %p143 = scmp.eq.s32.totalorder %s18, 0
      %p144 = por %p142, %p143
      %p145 = scmp.ne.s32.totalorder %s133, %s134
      %p146 = scmp.eq.s32.totalorder %s19, 3
      %p147 = por %p145, %p146
      %p149 = scmp.ne.s32.totalorder %s134, %s148
      %p150 = scmp.eq.s32.totalorder %s19, 0
      %p151 = por %p149, %p150
      %s153 = sadd.s32 %s152, 1
      %p156 = scmp.eq.s32.totalorder %s13, 3
      %p157 = scmp.ne.s32.totalorder %s152, %s154
      %p158 = scmp.eq.s32.totalorder %s13, 0
      %p159 = por %p157, %p158
      %p160 = scmp.ne.s32.totalorder %s152, %s154
      %p161 = scmp.eq.s32.totalorder %s18, 3
      %p162 = por %p160, %p161
      %p163 = scmp.ne.s32.totalorder %s154, %s155
      %p164 = scmp.eq.s32.totalorder %s18, 0
      %p165 = por %p163, %p164
      %p166 = scmp.ne.s32.totalorder %s154, %s155
      %p167 = scmp.eq.s32.totalorder %s19, 3
      %p168 = por %p166, %p167
      %p170 = scmp.ne.s32.totalorder %s155, %s169
      %p171 = scmp.eq.s32.totalorder %s19, 0
      %p172 = por %p170, %p171
      %s173 = ssub.s32 %s13, %s20
      %p174 = scmp.eq.s32.totalorder %s173, 0
      %s176 = sadd.s32 %s175, 1
      %s177 = scalar_select %p174, %s175, %s176
      %p180 = pneg %p174
      %p181 = scmp.eq.s32.totalorder %s13, 3
      %p182 = por %p180, %p181
      %p183 = scmp.ne.s32.totalorder %s175, %s178
      %p184 = scmp.eq.s32.totalorder %s13, 0
      %p185 = por %p183, %p184
      %p186 = scmp.ne.s32.totalorder %s175, %s178
      %p187 = scmp.eq.s32.totalorder %s18, 3
      %p188 = por %p186, %p187
      %p189 = scmp.ne.s32.totalorder %s178, %s179
      %p190 = scmp.eq.s32.totalorder %s18, 0
      %p191 = por %p189, %p190
      %p192 = scmp.ne.s32.totalorder %s178, %s179
      %p193 = scmp.eq.s32.totalorder %s19, 3
      %p194 = por %p192, %p193
      %p196 = scmp.ne.s32.totalorder %s179, %s195
      %p197 = scmp.eq.s32.totalorder %s19, 0
      %p198 = por %p196, %p197
      %p199 = scmp.le.s32.totalorder 1, %s13
      %p200 = scmp.lt.s32.totalorder %s13, 5
      %p201 = pnand %p199, %p200
      %p202 = pneg %p201
      // Predicated region
      $region9: #{tpu_custom_call.1} parent=5 // pred_check
        _
      $region10: #{tpu_custom_call.1} parent=5 // pred_check_branch
        %204 = sbr.rel (%p201) target = $region12
      $region11: #{tpu_custom_call.1} parent=5 // pred_region
        %s205 = ssub.s32 %s13, 1
        // Predicated region
        $region13: #{tpu_custom_call.1} parent=11 // pred_check
          %p206 = pneg %p60
        $region14: #{tpu_custom_call.1} parent=11 // pred_check_branch
          %208 = sbr.rel (%p206) target = $region16
        $region15: #{tpu_custom_call.1} parent=11 // pred_region
          _
        $region16: #{tpu_custom_call.1} parent=11 // pred_fallthru
          _
        // Predicated region
        $region17: #{tpu_custom_call.1} parent=11 // pred_check
          %p209 = pneg %p81
        $region18: #{tpu_custom_call.1} parent=11 // pred_check_branch
          %211 = sbr.rel (%p209) target = $region20
        $region19: #{tpu_custom_call.1} parent=11 // pred_region
          _
        $region20: #{tpu_custom_call.1} parent=11 // pred_fallthru
          _
        // Predicated region
        $region21: #{tpu_custom_call.1} parent=11 // pred_check
          %p212 = pneg %p102
        $region22: #{tpu_custom_call.1} parent=11 // pred_check_branch
          %214 = sbr.rel (%p212) target = $region24
        $region23: #{tpu_custom_call.1} parent=11 // pred_region
          _
        $region24: #{tpu_custom_call.1} parent=11 // pred_fallthru
          _
        // Predicated region
        $region25: #{tpu_custom_call.1} parent=11 // pred_check
          %p215 = pneg %p123
        $region26: #{tpu_custom_call.1} parent=11 // pred_check_branch
          %217 = sbr.rel (%p215) target = $region28
        $region27: #{tpu_custom_call.1} parent=11 // pred_region
          _
        $region28: #{tpu_custom_call.1} parent=11 // pred_fallthru
          _
        // Predicated region
        $region29: #{tpu_custom_call.1} parent=11 // pred_check
          %p218 = pneg %p144
        $region30: #{tpu_custom_call.1} parent=11 // pred_check_branch
          %220 = sbr.rel (%p218) target = $region32
        $region31: #{tpu_custom_call.1} parent=11 // pred_region
          _
        $region32: #{tpu_custom_call.1} parent=11 // pred_fallthru
          _
        // Predicated region
        $region33: #{tpu_custom_call.1} parent=11 // pred_check
          %p221 = pneg %p165
        $region34: #{tpu_custom_call.1} parent=11 // pred_check_branch
          %223 = sbr.rel (%p221) target = $region36
        $region35: #{tpu_custom_call.1} parent=11 // pred_region
          _
        $region36: #{tpu_custom_call.1} parent=11 // pred_fallthru
          _
      $region12: #{tpu_custom_call.1} parent=5 // pred_fallthru
        _
      %p224 = scmp.lt.s32.totalorder %s13, 4
      // Predicated region
      $region37: #{tpu_custom_call.1} parent=5 // pred_check
        %p225 = pneg %p224
      $region38: #{tpu_custom_call.1} parent=5 // pred_check_branch
        %227 = sbr.rel (%p225) target = $region40
      $region39: #{tpu_custom_call.1} parent=5 // pred_region
        // Predicated region
        $region41: #{tpu_custom_call.1} parent=39 // pred_check
          %p228 = pneg %p33
        $region42: #{tpu_custom_call.1} parent=39 // pred_check_branch
          %230 = sbr.rel (%p228) target = $region44
        $region43: #{tpu_custom_call.1} parent=39 // pred_region
          %s231 = smul.u32 64, %s13
          %s232 = ssub.s32 250, %s231
          %p233 = scmp.lt.s32.totalorder %s232, 64
          %s234 = scalar_select %p233, %s232, 64
          %s235 = smul.u32 128, %s234
          %p236 = scmp.lt.s32.totalorder %s231, 249
          %s237 = scalar_select %p236, %s231, 249
          %s238 = smul.addr %s237, 8
          %s239 = scalar_lea.vmem %s0, %s238
          %s240 = smul.u32 64, %s13
          %s241 = ssub.s32 250, %s240
          %p242 = scmp.lt.s32.totalorder %s241, 64
          %s243 = scalar_select %p242, %s241, 64
          %s244 = smul.u32 128, %s243
        $region44: #{tpu_custom_call.1} parent=39 // pred_fallthru
          _
      $region40: #{tpu_custom_call.1} parent=5 // pred_fallthru
        _
      %p245 = scmp.le.s32.totalorder 1, %s13
      %p246 = scmp.lt.s32.totalorder %s13, 5
      %p247 = pnand %p245, %p246
      %p248 = pneg %p247
      // Predicated region
      $region45: #{tpu_custom_call.1} parent=5 // pred_check
        _
      $region46: #{tpu_custom_call.1} parent=5 // pred_check_branch
        %250 = sbr.rel (%p247) target = $region48
      $region47: #{tpu_custom_call.1} parent=5 // pred_region
        %s251 = ssub.s32 %s13, 1
        %s252 = smul.u32 64, %s18
        %s253 = ssub.s32 250, %s252
        %p254 = scmp.lt.s32.totalorder %s253, 64
        %s255 = scalar_select %p254, %s253, 64
        %s256 = smul.u32 128, %s255
        %p257 = scmp.lt.s32.totalorder %s252, 249
        %s258 = scalar_select %p257, %s252, 249
        %s259 = smul.addr %s258, 8
        %s260 = scalar_lea.vmem %s0, %s259
        %p261 = pneg %p39
        %p262 = pneg %p36
        %p263 = pneg %p60
        %p264 = pneg %p57
        %p265 = pneg %p81
        %p266 = pneg %p78
        %p267 = pneg %p102
        %p268 = pneg %p99
        %p269 = pneg %p123
        %p270 = pneg %p120
        %p271 = pneg %p144
        %p272 = pneg %p141
        %p273 = pneg %p165
        %p274 = pneg %p162
        %p275 = pneg %p191
        %p276 = pneg %p188
        %s277 = sand.u32 %s178, 1
        %s278 = sand.u32 %s178, 1
        %s279 = smul.addr %s278, 512
        %s280 = scalar_lea.vmem [#allocation2], %s279
        %s281 = smul.u32 64, %s18
        %s282 = ssub.s32 250, %s281
        %p283 = scmp.lt.s32.totalorder %s282, 64
        %s284 = scalar_select %p283, %s282, 64
        %s285 = smul.u32 128, %s284
        %p286 = scmp.lt.s32.totalorder %s281, 249
        %s287 = scalar_select %p286, %s281, 249
        %s288 = smul.addr %s287, 8
        %s289 = scalar_lea.vmem %s0, %s288
        %s290 = smul.u32 64, %s18
        %s291 = ssub.s32 250, %s290
        %p292 = scmp.lt.s32.totalorder %s291, 64
        %s293 = scalar_select %p292, %s291, 64
        %s294 = smul.u32 128, %s293
        %s295 = smul.u32 64, %s18
        %s296 = ssub.s32 250, %s295
        %p297 = scmp.lt.s32.totalorder %s296, 64
        %s298 = scalar_select %p297, %s296, 64
        %s299 = smul.u32 128, %s298
        %v301 = vld [vmem:[%s289] sm:$0xff]
        %v302 = vld [vmem:[%s289 + $0x8] sm:$0xff]
        %v303 = vld [vmem:[%s289 + $0x10] sm:$0xff]
        %v304 = vld [vmem:[%s289 + $0x18] sm:$0xff]
        %v305 = vld [vmem:[%s289 + $0x20] sm:$0xff]
        %v306 = vld [vmem:[%s289 + $0x28] sm:$0xff]
        %v307 = vld [vmem:[%s289 + $0x30] sm:$0xff]
        %v308 = vld [vmem:[%s289 + $0x38] sm:$0xff]
        %v309 = vld [vmem:[%s289 + $0x40] sm:$0xff]
        %v310 = vld [vmem:[%s289 + $0x48] sm:$0xff]
        %v311 = vld [vmem:[%s289 + $0x50] sm:$0xff]
        %v312 = vld [vmem:[%s289 + $0x58] sm:$0xff]
        %v313 = vld [vmem:[%s289 + $0x60] sm:$0xff]
        %v314 = vld [vmem:[%s289 + $0x68] sm:$0xff]
        %v315 = vld [vmem:[%s289 + $0x70] sm:$0xff]
        %v316 = vld [vmem:[%s289 + $0x78] sm:$0xff]
        %v317 = vld [vmem:[%s289 + $0x80] sm:$0xff]
        %v318 = vld [vmem:[%s289 + $0x88] sm:$0xff]
        %v319 = vld [vmem:[%s289 + $0x90] sm:$0xff]
        %v320 = vld [vmem:[%s289 + $0x98] sm:$0xff]
        %v321 = vld [vmem:[%s289 + $0xa0] sm:$0xff]
        %v322 = vld [vmem:[%s289 + $0xa8] sm:$0xff]
        %v323 = vld [vmem:[%s289 + $0xb0] sm:$0xff]
        %v324 = vld [vmem:[%s289 + $0xb8] sm:$0xff]
        %v325 = vld [vmem:[%s289 + $0xc0] sm:$0xff]
        %v326 = vld [vmem:[%s289 + $0xc8] sm:$0xff]
        %v327 = vld [vmem:[%s289 + $0xd0] sm:$0xff]
        %v328 = vld [vmem:[%s289 + $0xd8] sm:$0xff]
        %v329 = vld [vmem:[%s289 + $0xe0] sm:$0xff]
        %v330 = vld [vmem:[%s289 + $0xe8] sm:$0xff]
        %v331 = vld [vmem:[%s289 + $0xf0] sm:$0xff]
        %v332 = vld [vmem:[%s289 + $0xf8] sm:$0xff]
        %v333 = vld [vmem:[%s289 + $0x100] sm:$0xff]
        %v334 = vld [vmem:[%s289 + $0x108] sm:$0xff]
        %v335 = vld [vmem:[%s289 + $0x110] sm:$0xff]
        %v336 = vld [vmem:[%s289 + $0x118] sm:$0xff]
        %v337 = vld [vmem:[%s289 + $0x120] sm:$0xff]
        %v338 = vld [vmem:[%s289 + $0x128] sm:$0xff]
        %v339 = vld [vmem:[%s289 + $0x130] sm:$0xff]
        %v340 = vld [vmem:[%s289 + $0x138] sm:$0xff]
        %v341 = vld [vmem:[%s289 + $0x140] sm:$0xff]
        %v342 = vld [vmem:[%s289 + $0x148] sm:$0xff]
        %v343 = vld [vmem:[%s289 + $0x150] sm:$0xff]
        %v344 = vld [vmem:[%s289 + $0x158] sm:$0xff]
        %v345 = vld [vmem:[%s289 + $0x160] sm:$0xff]
        %v346 = vld [vmem:[%s289 + $0x168] sm:$0xff]
        %v347 = vld [vmem:[%s289 + $0x170] sm:$0xff]
        %v348 = vld [vmem:[%s289 + $0x178] sm:$0xff]
        %v349 = vld [vmem:[%s289 + $0x180] sm:$0xff]
        %v350 = vld [vmem:[%s289 + $0x188] sm:$0xff]
        %v351 = vld [vmem:[%s289 + $0x190] sm:$0xff]
        %v352 = vld [vmem:[%s289 + $0x198] sm:$0xff]
        %v353 = vld [vmem:[%s289 + $0x1a0] sm:$0xff]
        %v354 = vld [vmem:[%s289 + $0x1a8] sm:$0xff]
        %v355 = vld [vmem:[%s289 + $0x1b0] sm:$0xff]
        %v356 = vld [vmem:[%s289 + $0x1b8] sm:$0xff]
        %v357 = vld [vmem:[%s289 + $0x1c0] sm:$0xff]
        %v358 = vld [vmem:[%s289 + $0x1c8] sm:$0xff]
        %v359 = vld [vmem:[%s289 + $0x1d0] sm:$0xff]
        %v360 = vld [vmem:[%s289 + $0x1d8] sm:$0xff]
        %v361 = vld [vmem:[%s289 + $0x1e0] sm:$0xff]
        %v362 = vld [vmem:[%s289 + $0x1e8] sm:$0xff]
        %v363 = vld [vmem:[%s289 + $0x1f0] sm:$0xff]
        %v364 = vld [vmem:[%s289 + $0x1f8] sm:$0xff]
        %v365 = vpack.c.bf16 %v302, %v301
        %v366 = vpack.c.bf16 %v304, %v303
        %v367 = vpack.c.bf16 %v306, %v305
        %v368 = vpack.c.bf16 %v308, %v307
        %v369 = vpack.c.bf16 %v310, %v309
        %v370 = vpack.c.bf16 %v312, %v311
        %v371 = vpack.c.bf16 %v314, %v313
        %v372 = vpack.c.bf16 %v316, %v315
        %v373 = vpack.c.bf16 %v318, %v317
        %v374 = vpack.c.bf16 %v320, %v319
        %v375 = vpack.c.bf16 %v322, %v321
        %v376 = vpack.c.bf16 %v324, %v323
        %v377 = vpack.c.bf16 %v326, %v325
        %v378 = vpack.c.bf16 %v328, %v327
        %v379 = vpack.c.bf16 %v330, %v329
        %v380 = vpack.c.bf16 %v332, %v331
        %v381 = vpack.c.bf16 %v334, %v333
        %v382 = vpack.c.bf16 %v336, %v335
        %v383 = vpack.c.bf16 %v338, %v337
        %v384 = vpack.c.bf16 %v340, %v339
        %v385 = vpack.c.bf16 %v342, %v341
        %v386 = vpack.c.bf16 %v344, %v343
        %v387 = vpack.c.bf16 %v346, %v345
        %v388 = vpack.c.bf16 %v348, %v347
        %v389 = vpack.c.bf16 %v350, %v349
        %v390 = vpack.c.bf16 %v352, %v351
        %v391 = vpack.c.bf16 %v354, %v353
        %v392 = vpack.c.bf16 %v356, %v355
        %v393 = vpack.c.bf16 %v358, %v357
        %v394 = vpack.c.bf16 %v360, %v359
        %v395 = vpack.c.bf16 %v362, %v361
        %v396 = vpack.c.bf16 %v364, %v363
        %v397 = vld [vmem:[%s1] sm:$0xf]
        %v398 = vld [vmem:[%s1 + $0x4] sm:$0xf]
        %v399 = vld [vmem:[%s1 + $0x8] sm:$0xf]
        %v400 = vld [vmem:[%s1 + $0xc] sm:$0xf]
        %v401 = vld [vmem:[%s2] sm:$0x1]
        %v403 = vlaneseq
        %v404 = vshrl.u32 %v403, 7
        %v405 = vsub.s32 0, %v404
        %v406 = vrot.slane %v401, %v405
        %v412 = vunpack.c.l.b16 %v397
        %v413 = vunpack.c.l.b16 %v398
        %v414 = vunpack.c.l.b16 %v399
        %v415 = vunpack.c.l.b16 %v400
        %v416 = vpack.c.b16 %v413, %v412
        %v417 = vpack.c.b16 %v415, %v414
        %vm420 = vcmask 261120
        %v422 = vsel %vm420, %v365, 0
        %v425 = vsel %vm420, %v366, 0
        %v428 = vsel %vm420, %v367, 0
        %v431 = vsel %vm420, %v368, 0
        %v434 = vsel %vm420, %v369, 0
        %v437 = vsel %vm420, %v370, 0
        %v440 = vsel %vm420, %v371, 0
        %v443 = vsel %vm420, %v372, 0
        %v446 = vsel %vm420, %v373, 0
        %v449 = vsel %vm420, %v374, 0
        %v452 = vsel %vm420, %v375, 0
        %v455 = vsel %vm420, %v376, 0
        %v458 = vsel %vm420, %v377, 0
        %v461 = vsel %vm420, %v378, 0
        %v464 = vsel %vm420, %v379, 0
        %v467 = vsel %vm420, %v380, 0
        %v470 = vsel %vm420, %v381, 0
        %v473 = vsel %vm420, %v382, 0
        %v476 = vsel %vm420, %v383, 0
        %v479 = vsel %vm420, %v384, 0
        %v482 = vsel %vm420, %v385, 0
        %v485 = vsel %vm420, %v386, 0
        %v488 = vsel %vm420, %v387, 0
        %v491 = vsel %vm420, %v388, 0
        %v494 = vsel %vm420, %v389, 0
        %v497 = vsel %vm420, %v390, 0
        %v500 = vsel %vm420, %v391, 0
        %v503 = vsel %vm420, %v392, 0
        %v506 = vsel %vm420, %v393, 0
        %v509 = vsel %vm420, %v394, 0
        %v512 = vsel %vm420, %v395, 0
        %v515 = vsel %vm420, %v396, 0
        %517 = vmatprep.subr.bf16.mxu0 0
        %518 = vmatpush1.bf16.msra.mxu0 0
        %519 = vmatprep.subr.bf16.mxu0 0
        %520 = vmatpush1.bf16.msra.mxu0 0
        %521 = vmatprep.subr.bf16.mxu0 0
        %522 = vmatpush1.bf16.msra.mxu0 0
        %523 = vmatprep.subr.bf16.mxu0 0
        %524 = vmatpush1.bf16.msra.mxu0 0
        %525 = vmatprep.subr.bf16.mxu0 0
        %526 = vmatpush1.bf16.msra.mxu0 0
        %527 = vmatprep.subr.bf16.mxu0 0
        %528 = vmatpush1.bf16.msra.mxu0 0
        %529 = vmatprep.subr.bf16.mxu0 0
        %530 = vmatpush1.bf16.msra.mxu0 %v417
        %531 = vmatprep.subr.bf16.mxu0 0
        %532 = vmatpush1.bf16.msra.mxu0 %v416
        %533 = vmatprep.subr.bf16.mxu0 0
        %534 = vmatpush2.bf16.msra.mxu0 0
        %535 = vmatprep.subr.bf16.mxu0 0
        %536 = vmatpush2.bf16.msra.mxu0 0
        %537 = vmatprep.subr.bf16.mxu0 0
        %538 = vmatpush2.bf16.msra.mxu0 0
        %539 = vmatprep.subr.bf16.mxu0 0
        %540 = vmatpush2.bf16.msra.mxu0 0
        %541 = vmatprep.subr.bf16.mxu0 0
        %542 = vmatpush2.bf16.msra.mxu0 0
        %543 = vmatprep.subr.bf16.mxu0 0
        %544 = vmatpush2.bf16.msra.mxu0 0
        %545 = vmatprep.subr.bf16.mxu0 0
        %546 = vmatpush2.bf16.msra.mxu0 0
        %547 = vmatprep.subr.bf16.mxu0 0
        %548 = vmatpush2.bf16.msra.mxu0 0
        %549 = vmatprep.mubr.bf16.mxu0 0
        %550 = vmatmul.mubr.bf16.gmra.mxu0 %v422
        %v551 = vpop.f32.mrf.mxu0
        %v552 = vadd.f32 %v406, %v551
        %v553 = vpop.f32.mrf.mxu0
        %v554 = vpop.f32.mrf.mxu0
        %v555 = vadd.f32 %v406, %v554
        %v556 = vpop.f32.mrf.mxu0
        %557 = vmatprep.mubr.bf16.mxu0 0
        %558 = vmatmul.mubr.bf16.gmra.mxu0 %v425
        %v559 = vpop.f32.mrf.mxu0
        %v560 = vadd.f32 %v406, %v559
        %v561 = vpop.f32.mrf.mxu0
        %v562 = vpop.f32.mrf.mxu0
        %v563 = vadd.f32 %v406, %v562
        %v564 = vpop.f32.mrf.mxu0
        %565 = vmatprep.mubr.bf16.mxu0 0
        %566 = vmatmul.mubr.bf16.gmra.mxu0 %v428
        %v567 = vpop.f32.mrf.mxu0
        %v568 = vadd.f32 %v406, %v567
        %v569 = vpop.f32.mrf.mxu0
        %v570 = vpop.f32.mrf.mxu0
        %v571 = vadd.f32 %v406, %v570
        %v572 = vpop.f32.mrf.mxu0
        %573 = vmatprep.mubr.bf16.mxu0 0
        %574 = vmatmul.mubr.bf16.gmra.mxu0 %v431
        %v575 = vpop.f32.mrf.mxu0
        %v576 = vadd.f32 %v406, %v575
        %v577 = vpop.f32.mrf.mxu0
        %v578 = vpop.f32.mrf.mxu0
        %v579 = vadd.f32 %v406, %v578
        %v580 = vpop.f32.mrf.mxu0
        %581 = vmatprep.mubr.bf16.mxu0 0
        %582 = vmatmul.mubr.bf16.gmra.mxu0 %v434
        %v583 = vpop.f32.mrf.mxu0
        %v584 = vadd.f32 %v406, %v583
        %v585 = vpop.f32.mrf.mxu0
        %v586 = vpop.f32.mrf.mxu0
        %v587 = vadd.f32 %v406, %v586
        %v588 = vpop.f32.mrf.mxu0
        %589 = vmatprep.mubr.bf16.mxu0 0
        %590 = vmatmul.mubr.bf16.gmra.mxu0 %v437
        %v591 = vpop.f32.mrf.mxu0
        %v592 = vadd.f32 %v406, %v591
        %v593 = vpop.f32.mrf.mxu0
        %v594 = vpop.f32.mrf.mxu0
        %v595 = vadd.f32 %v406, %v594
        %v596 = vpop.f32.mrf.mxu0
        %597 = vmatprep.mubr.bf16.mxu0 0
        %598 = vmatmul.mubr.bf16.gmra.mxu0 %v440
        %v599 = vpop.f32.mrf.mxu0
        %v600 = vadd.f32 %v406, %v599
        %v601 = vpop.f32.mrf.mxu0
        %v602 = vpop.f32.mrf.mxu0
        %v603 = vadd.f32 %v406, %v602
        %v604 = vpop.f32.mrf.mxu0
        %605 = vmatprep.mubr.bf16.mxu0 0
        %606 = vmatmul.mubr.bf16.gmra.mxu0 %v443
        %v607 = vpop.f32.mrf.mxu0
        %v608 = vadd.f32 %v406, %v607
        %v609 = vpop.f32.mrf.mxu0
        %v610 = vpop.f32.mrf.mxu0
        %v611 = vadd.f32 %v406, %v610
        %v612 = vpop.f32.mrf.mxu0
        %613 = vmatprep.mubr.bf16.mxu0 0
        %614 = vmatmul.mubr.bf16.gmra.mxu0 %v446
        %v615 = vpop.f32.mrf.mxu0
        %v616 = vadd.f32 %v406, %v615
        %v617 = vpop.f32.mrf.mxu0
        %v618 = vpop.f32.mrf.mxu0
        %v619 = vadd.f32 %v406, %v618
        %v620 = vpop.f32.mrf.mxu0
        %621 = vmatprep.mubr.bf16.mxu0 0
        %622 = vmatmul.mubr.bf16.gmra.mxu0 %v449
        %v623 = vpop.f32.mrf.mxu0
        %v624 = vadd.f32 %v406, %v623
        %v625 = vpop.f32.mrf.mxu0
        %v626 = vpop.f32.mrf.mxu0
        %v627 = vadd.f32 %v406, %v626
        %v628 = vpop.f32.mrf.mxu0
        %629 = vmatprep.mubr.bf16.mxu0 0
        %630 = vmatmul.mubr.bf16.gmra.mxu0 %v452
        %v631 = vpop.f32.mrf.mxu0
        %v632 = vadd.f32 %v406, %v631
        %v633 = vpop.f32.mrf.mxu0
        %v634 = vpop.f32.mrf.mxu0
        %v635 = vadd.f32 %v406, %v634
        %v636 = vpop.f32.mrf.mxu0
        %637 = vmatprep.mubr.bf16.mxu0 0
        %638 = vmatmul.mubr.bf16.gmra.mxu0 %v455
        %v639 = vpop.f32.mrf.mxu0
        %v640 = vadd.f32 %v406, %v639
        %v641 = vpop.f32.mrf.mxu0
        %v642 = vpop.f32.mrf.mxu0
        %v643 = vadd.f32 %v406, %v642
        %v644 = vpop.f32.mrf.mxu0
        %645 = vmatprep.mubr.bf16.mxu0 0
        %646 = vmatmul.mubr.bf16.gmra.mxu0 %v458
        %v647 = vpop.f32.mrf.mxu0
        %v648 = vadd.f32 %v406, %v647
        %v649 = vpop.f32.mrf.mxu0
        %v650 = vpop.f32.mrf.mxu0
        %v651 = vadd.f32 %v406, %v650
        %v652 = vpop.f32.mrf.mxu0
        %653 = vmatprep.mubr.bf16.mxu0 0
        %654 = vmatmul.mubr.bf16.gmra.mxu0 %v461
        %v655 = vpop.f32.mrf.mxu0
        %v656 = vadd.f32 %v406, %v655
        %v657 = vpop.f32.mrf.mxu0
        %v658 = vpop.f32.mrf.mxu0
        %v659 = vadd.f32 %v406, %v658
        %v660 = vpop.f32.mrf.mxu0
        %661 = vmatprep.mubr.bf16.mxu0 0
        %662 = vmatmul.mubr.bf16.gmra.mxu0 %v464
        %v663 = vpop.f32.mrf.mxu0
        %v664 = vadd.f32 %v406, %v663
        %v665 = vpop.f32.mrf.mxu0
        %v666 = vpop.f32.mrf.mxu0
        %v667 = vadd.f32 %v406, %v666
        %v668 = vpop.f32.mrf.mxu0
        %669 = vmatprep.mubr.bf16.mxu0 0
        %670 = vmatmul.mubr.bf16.gmra.mxu0 %v467
        %v671 = vpop.f32.mrf.mxu0
        %v672 = vadd.f32 %v406, %v671
        %v673 = vpop.f32.mrf.mxu0
        %v674 = vpop.f32.mrf.mxu0
        %v675 = vadd.f32 %v406, %v674
        %v676 = vpop.f32.mrf.mxu0
        %677 = vmatprep.mubr.bf16.mxu0 0
        %678 = vmatmul.mubr.bf16.gmra.mxu0 %v470
        %v679 = vpop.f32.mrf.mxu0
        %v680 = vadd.f32 %v406, %v679
        %v681 = vpop.f32.mrf.mxu0
        %v682 = vpop.f32.mrf.mxu0
        %v683 = vadd.f32 %v406, %v682
        %v684 = vpop.f32.mrf.mxu0
        %685 = vmatprep.mubr.bf16.mxu0 0
        %686 = vmatmul.mubr.bf16.gmra.mxu0 %v473
        %v687 = vpop.f32.mrf.mxu0
        %v688 = vadd.f32 %v406, %v687
        %v689 = vpop.f32.mrf.mxu0
        %v690 = vpop.f32.mrf.mxu0
        %v691 = vadd.f32 %v406, %v690
        %v692 = vpop.f32.mrf.mxu0
        %693 = vmatprep.mubr.bf16.mxu0 0
        %694 = vmatmul.mubr.bf16.gmra.mxu0 %v476
        %v695 = vpop.f32.mrf.mxu0
        %v696 = vadd.f32 %v406, %v695
        %v697 = vpop.f32.mrf.mxu0
        %v698 = vpop.f32.mrf.mxu0
        %v699 = vadd.f32 %v406, %v698
        %v700 = vpop.f32.mrf.mxu0
        %701 = vmatprep.mubr.bf16.mxu0 0
        %702 = vmatmul.mubr.bf16.gmra.mxu0 %v479
        %v703 = vpop.f32.mrf.mxu0
        %v704 = vadd.f32 %v406, %v703
        %v705 = vpop.f32.mrf.mxu0
        %v706 = vpop.f32.mrf.mxu0
        %v707 = vadd.f32 %v406, %v706
        %v708 = vpop.f32.mrf.mxu0
        %709 = vmatprep.mubr.bf16.mxu0 0
        %710 = vmatmul.mubr.bf16.gmra.mxu0 %v482
        %v711 = vpop.f32.mrf.mxu0
        %v712 = vadd.f32 %v406, %v711
        %v713 = vpop.f32.mrf.mxu0
        %v714 = vpop.f32.mrf.mxu0
        %v715 = vadd.f32 %v406, %v714
        %v716 = vpop.f32.mrf.mxu0
        %717 = vmatprep.mubr.bf16.mxu0 0
        %718 = vmatmul.mubr.bf16.gmra.mxu0 %v485
        %v719 = vpop.f32.mrf.mxu0
        %v720 = vadd.f32 %v406, %v719
        %v721 = vpop.f32.mrf.mxu0
        %v722 = vpop.f32.mrf.mxu0
        %v723 = vadd.f32 %v406, %v722
        %v724 = vpop.f32.mrf.mxu0
        %725 = vmatprep.mubr.bf16.mxu0 0
        %726 = vmatmul.mubr.bf16.gmra.mxu0 %v488
        %v727 = vpop.f32.mrf.mxu0
        %v728 = vadd.f32 %v406, %v727
        %v729 = vpop.f32.mrf.mxu0
        %v730 = vpop.f32.mrf.mxu0
        %v731 = vadd.f32 %v406, %v730
        %v732 = vpop.f32.mrf.mxu0
        %733 = vmatprep.mubr.bf16.mxu0 0
        %734 = vmatmul.mubr.bf16.gmra.mxu0 %v491
        %v735 = vpop.f32.mrf.mxu0
        %v736 = vadd.f32 %v406, %v735
        %v737 = vpop.f32.mrf.mxu0
        %v738 = vpop.f32.mrf.mxu0
        %v739 = vadd.f32 %v406, %v738
        %v740 = vpop.f32.mrf.mxu0
        %741 = vmatprep.mubr.bf16.mxu0 0
        %742 = vmatmul.mubr.bf16.gmra.mxu0 %v494
        %v743 = vpop.f32.mrf.mxu0
        %v744 = vadd.f32 %v406, %v743
        %v745 = vpop.f32.mrf.mxu0
        %v746 = vpop.f32.mrf.mxu0
        %v747 = vadd.f32 %v406, %v746
        %v748 = vpop.f32.mrf.mxu0
        %749 = vmatprep.mubr.bf16.mxu0 0
        %750 = vmatmul.mubr.bf16.gmra.mxu0 %v497
        %v751 = vpop.f32.mrf.mxu0
        %v752 = vadd.f32 %v406, %v751
        %v753 = vpop.f32.mrf.mxu0
        %v754 = vpop.f32.mrf.mxu0
        %v755 = vadd.f32 %v406, %v754
        %v756 = vpop.f32.mrf.mxu0
        %757 = vmatprep.mubr.bf16.mxu0 0
        %758 = vmatmul.mubr.bf16.gmra.mxu0 %v500
        %v759 = vpop.f32.mrf.mxu0
        %v760 = vadd.f32 %v406, %v759
        %v761 = vpop.f32.mrf.mxu0
        %v762 = vpop.f32.mrf.mxu0
        %v763 = vadd.f32 %v406, %v762
        %v764 = vpop.f32.mrf.mxu0
        %765 = vmatprep.mubr.bf16.mxu0 0
        %766 = vmatmul.mubr.bf16.gmra.mxu0 %v503
        %v767 = vpop.f32.mrf.mxu0
        %v768 = vadd.f32 %v406, %v767
        %v769 = vpop.f32.mrf.mxu0
        %v770 = vpop.f32.mrf.mxu0
        %v771 = vadd.f32 %v406, %v770
        %v772 = vpop.f32.mrf.mxu0
        %773 = vmatprep.mubr.bf16.mxu0 0
        %774 = vmatmul.mubr.bf16.gmra.mxu0 %v506
        %v775 = vpop.f32.mrf.mxu0
        %v776 = vadd.f32 %v406, %v775
        %v777 = vpop.f32.mrf.mxu0
        %v778 = vpop.f32.mrf.mxu0
        %v779 = vadd.f32 %v406, %v778
        %v780 = vpop.f32.mrf.mxu0
        %781 = vmatprep.mubr.bf16.mxu0 0
        %782 = vmatmul.mubr.bf16.gmra.mxu0 %v509
        %v783 = vpop.f32.mrf.mxu0
        %v784 = vadd.f32 %v406, %v783
        %v785 = vpop.f32.mrf.mxu0
        %v786 = vpop.f32.mrf.mxu0
        %v787 = vadd.f32 %v406, %v786
        %v788 = vpop.f32.mrf.mxu0
        %789 = vmatprep.mubr.bf16.mxu0 0
        %790 = vmatmul.mubr.bf16.gmra.mxu0 %v512
        %v791 = vpop.f32.mrf.mxu0
        %v792 = vadd.f32 %v406, %v791
        %v793 = vpop.f32.mrf.mxu0
        %v794 = vpop.f32.mrf.mxu0
        %v795 = vadd.f32 %v406, %v794
        %v796 = vpop.f32.mrf.mxu0
        %797 = vmatprep.mubr.bf16.mxu0 0
        %798 = vmatmul.mubr.bf16.gmra.mxu0 %v515
        %v799 = vpop.f32.mrf.mxu0
        %v800 = vadd.f32 %v406, %v799
        %v801 = vpop.f32.mrf.mxu0
        %v802 = vpop.f32.mrf.mxu0
        %v803 = vadd.f32 %v406, %v802
        %v804 = vpop.f32.mrf.mxu0
        %805 = vdwg.mxu0
        %v806 = vpack.c.bf16 %v555, %v552
        %v807 = vpack.c.bf16 %v563, %v560
        %v808 = vpack.c.bf16 %v571, %v568
        %v809 = vpack.c.bf16 %v579, %v576
        %v810 = vpack.c.bf16 %v587, %v584
        %v811 = vpack.c.bf16 %v595, %v592
        %v812 = vpack.c.bf16 %v603, %v600
        %v813 = vpack.c.bf16 %v611, %v608
        %v814 = vpack.c.bf16 %v619, %v616
        %v815 = vpack.c.bf16 %v627, %v624
        %v816 = vpack.c.bf16 %v635, %v632
        %v817 = vpack.c.bf16 %v643, %v640
        %v818 = vpack.c.bf16 %v651, %v648
        %v819 = vpack.c.bf16 %v659, %v656
        %v820 = vpack.c.bf16 %v667, %v664
        %v821 = vpack.c.bf16 %v675, %v672
        %v822 = vpack.c.bf16 %v683, %v680
        %v823 = vpack.c.bf16 %v691, %v688
        %v824 = vpack.c.bf16 %v699, %v696
        %v825 = vpack.c.bf16 %v707, %v704
        %v826 = vpack.c.bf16 %v715, %v712
        %v827 = vpack.c.bf16 %v723, %v720
        %v828 = vpack.c.bf16 %v731, %v728
        %v829 = vpack.c.bf16 %v739, %v736
        %v830 = vpack.c.bf16 %v747, %v744
        %v831 = vpack.c.bf16 %v755, %v752
        %v832 = vpack.c.bf16 %v763, %v760
        %v833 = vpack.c.bf16 %v771, %v768
        %v834 = vpack.c.bf16 %v779, %v776
        %v835 = vpack.c.bf16 %v787, %v784
        %v836 = vpack.c.bf16 %v795, %v792
        %v837 = vpack.c.bf16 %v803, %v800
        %v838 = vtanh.bf16.pop %v806
        %v839 = vtanh.bf16.pop %v807
        %v840 = vtanh.bf16.pop %v808
        %v841 = vtanh.bf16.pop %v809
        %v842 = vtanh.bf16.pop %v810
        %v843 = vtanh.bf16.pop %v811
        %v844 = vtanh.bf16.pop %v812
        %v845 = vtanh.bf16.pop %v813
        %v846 = vtanh.bf16.pop %v814
        %v847 = vtanh.bf16.pop %v815
        %v848 = vtanh.bf16.pop %v816
        %v849 = vtanh.bf16.pop %v817
        %v850 = vtanh.bf16.pop %v818
        %v851 = vtanh.bf16.pop %v819
        %v852 = vtanh.bf16.pop %v820
        %v853 = vtanh.bf16.pop %v821
        %v854 = vtanh.bf16.pop %v822
        %v855 = vtanh.bf16.pop %v823
        %v856 = vtanh.bf16.pop %v824
        %v857 = vtanh.bf16.pop %v825
        %v858 = vtanh.bf16.pop %v826
        %v859 = vtanh.bf16.pop %v827
        %v860 = vtanh.bf16.pop %v828
        %v861 = vtanh.bf16.pop %v829
        %v862 = vtanh.bf16.pop %v830
        %v863 = vtanh.bf16.pop %v831
        %v864 = vtanh.bf16.pop %v832
        %v865 = vtanh.bf16.pop %v833
        %v866 = vtanh.bf16.pop %v834
        %v867 = vtanh.bf16.pop %v835
        %v868 = vtanh.bf16.pop %v836
        %v869 = vtanh.bf16.pop %v837
        %v870 = vld [vmem:[%s3] sm:$0xf]
        %v871 = vld [vmem:[%s3 + $0x4] sm:$0xf]
        %v872 = vld [vmem:[%s3 + $0x8] sm:$0xf]
        %v873 = vld [vmem:[%s3 + $0xc] sm:$0xf]
        %v874 = vld [vmem:[%s3 + $0x10] sm:$0xf]
        %v875 = vld [vmem:[%s3 + $0x14] sm:$0xf]
        %v876 = vld [vmem:[%s3 + $0x18] sm:$0xf]
        %v877 = vld [vmem:[%s3 + $0x1c] sm:$0xf]
        %v878 = vld [vmem:[%s3 + $0x20] sm:$0xf]
        %v879 = vld [vmem:[%s3 + $0x24] sm:$0xf]
        %v880 = vld [vmem:[%s3 + $0x28] sm:$0xf]
        %v881 = vld [vmem:[%s3 + $0x2c] sm:$0xf]
        %v882 = vld [vmem:[%s3 + $0x30] sm:$0xf]
        %v883 = vld [vmem:[%s3 + $0x34] sm:$0xf]
        %v884 = vld [vmem:[%s3 + $0x38] sm:$0xf]
        %v885 = vld [vmem:[%s3 + $0x3c] sm:$0xf]
        %v886 = vld [vmem:[%s4] sm:$0x1]
        %v888 = vlaneseq
        %v889 = vshrl.u32 %v888, 7
        %v890 = vsub.s32 0, %v889
        %v891 = vrot.slane %v886, %v890
        %v909 = vunpack.c.l.b16 %v870
        %v910 = vunpack.c.l.b16 %v871
        %v911 = vunpack.c.l.b16 %v872
        %v912 = vunpack.c.l.b16 %v873
        %v913 = vunpack.c.l.b16 %v874
        %v914 = vunpack.c.l.b16 %v875
        %v915 = vunpack.c.l.b16 %v876
        %v916 = vunpack.c.l.b16 %v877
        %v917 = vunpack.c.l.b16 %v878
        %v918 = vunpack.c.l.b16 %v879
        %v919 = vunpack.c.l.b16 %v880
        %v920 = vunpack.c.l.b16 %v881
        %v921 = vunpack.c.l.b16 %v882
        %v922 = vunpack.c.l.b16 %v883
        %v923 = vunpack.c.l.b16 %v884
        %v924 = vunpack.c.l.b16 %v885
        %v925 = vpack.c.b16 %v910, %v909
        %v926 = vpack.c.b16 %v912, %v911
        %v927 = vpack.c.b16 %v914, %v913
        %v928 = vpack.c.b16 %v916, %v915
        %v929 = vpack.c.b16 %v918, %v917
        %v930 = vpack.c.b16 %v920, %v919
        %v931 = vpack.c.b16 %v922, %v921
        %v932 = vpack.c.b16 %v924, %v923
        %941 = vmatprep.subr.bf16.mxu0 0
        %942 = vmatpush1.bf16.msra.mxu0 %v932
        %943 = vmatprep.subr.bf16.mxu0 0
        %944 = vmatpush1.bf16.msra.mxu0 %v931
        %945 = vmatprep.subr.bf16.mxu0 0
        %946 = vmatpush1.bf16.msra.mxu0 %v930
        %947 = vmatprep.subr.bf16.mxu0 0
        %948 = vmatpush1.bf16.msra.mxu0 %v929
        %949 = vmatprep.subr.bf16.mxu0 0
        %950 = vmatpush1.bf16.msra.mxu0 %v928
        %951 = vmatprep.subr.bf16.mxu0 0
        %952 = vmatpush1.bf16.msra.mxu0 %v927
        %953 = vmatprep.subr.bf16.mxu0 0
        %954 = vmatpush1.bf16.msra.mxu0 %v926
        %955 = vmatprep.subr.bf16.mxu0 0
        %956 = vmatpush1.bf16.msra.mxu0 %v925
        %957 = vmatprep.subr.bf16.mxu0 0
        %958 = vmatpush2.bf16.msra.mxu0 0
        %959 = vmatprep.subr.bf16.mxu0 0
        %960 = vmatpush2.bf16.msra.mxu0 0
        %961 = vmatprep.subr.bf16.mxu0 0
        %962 = vmatpush2.bf16.msra.mxu0 0
        %963 = vmatprep.subr.bf16.mxu0 0
        %964 = vmatpush2.bf16.msra.mxu0 0
        %965 = vmatprep.subr.bf16.mxu0 0
        %966 = vmatpush2.bf16.msra.mxu0 0
        %967 = vmatprep.subr.bf16.mxu0 0
        %968 = vmatpush2.bf16.msra.mxu0 0
        %969 = vmatprep.subr.bf16.mxu0 0
        %970 = vmatpush2.bf16.msra.mxu0 0
        %971 = vmatprep.subr.bf16.mxu0 0
        %972 = vmatpush2.bf16.msra.mxu0 0
        %973 = vmatprep.mubr.bf16.mxu0 0
        %974 = vmatmul.mubr.bf16.gmra.mxu0 %v838
        %v975 = vpop.f32.mrf.mxu0
        %v976 = vadd.f32 %v891, %v975
        %v977 = vpop.f32.mrf.mxu0
        %v978 = vpop.f32.mrf.mxu0
        %v979 = vadd.f32 %v891, %v978
        %v980 = vpop.f32.mrf.mxu0
        %981 = vmatprep.mubr.bf16.mxu0 0
        %982 = vmatmul.mubr.bf16.gmra.mxu0 %v839
        %v983 = vpop.f32.mrf.mxu0
        %v984 = vadd.f32 %v891, %v983
        %v985 = vpop.f32.mrf.mxu0
        %v986 = vpop.f32.mrf.mxu0
        %v987 = vadd.f32 %v891, %v986
        %v988 = vpop.f32.mrf.mxu0
        %989 = vmatprep.mubr.bf16.mxu0 0
        %990 = vmatmul.mubr.bf16.gmra.mxu0 %v840
        %v991 = vpop.f32.mrf.mxu0
        %v992 = vadd.f32 %v891, %v991
        %v993 = vpop.f32.mrf.mxu0
        %v994 = vpop.f32.mrf.mxu0
        %v995 = vadd.f32 %v891, %v994
        %v996 = vpop.f32.mrf.mxu0
        %997 = vmatprep.mubr.bf16.mxu0 0
        %998 = vmatmul.mubr.bf16.gmra.mxu0 %v841
        %v999 = vpop.f32.mrf.mxu0
        %v1000 = vadd.f32 %v891, %v999
        %v1001 = vpop.f32.mrf.mxu0
        %v1002 = vpop.f32.mrf.mxu0
        %v1003 = vadd.f32 %v891, %v1002
        %v1004 = vpop.f32.mrf.mxu0
        %1005 = vmatprep.mubr.bf16.mxu0 0
        %1006 = vmatmul.mubr.bf16.gmra.mxu0 %v842
        %v1007 = vpop.f32.mrf.mxu0
        %v1008 = vadd.f32 %v891, %v1007
        %v1009 = vpop.f32.mrf.mxu0
        %v1010 = vpop.f32.mrf.mxu0
        %v1011 = vadd.f32 %v891, %v1010
        %v1012 = vpop.f32.mrf.mxu0
        %1013 = vmatprep.mubr.bf16.mxu0 0
        %1014 = vmatmul.mubr.bf16.gmra.mxu0 %v843
        %v1015 = vpop.f32.mrf.mxu0
        %v1016 = vadd.f32 %v891, %v1015
        %v1017 = vpop.f32.mrf.mxu0
        %v1018 = vpop.f32.mrf.mxu0
        %v1019 = vadd.f32 %v891, %v1018
        %v1020 = vpop.f32.mrf.mxu0
        %1021 = vmatprep.mubr.bf16.mxu0 0
        %1022 = vmatmul.mubr.bf16.gmra.mxu0 %v844
        %v1023 = vpop.f32.mrf.mxu0
        %v1024 = vadd.f32 %v891, %v1023
        %v1025 = vpop.f32.mrf.mxu0
        %v1026 = vpop.f32.mrf.mxu0
        %v1027 = vadd.f32 %v891, %v1026
        %v1028 = vpop.f32.mrf.mxu0
        %1029 = vmatprep.mubr.bf16.mxu0 0
        %1030 = vmatmul.mubr.bf16.gmra.mxu0 %v845
        %v1031 = vpop.f32.mrf.mxu0
        %v1032 = vadd.f32 %v891, %v1031
        %v1033 = vpop.f32.mrf.mxu0
        %v1034 = vpop.f32.mrf.mxu0
        %v1035 = vadd.f32 %v891, %v1034
        %v1036 = vpop.f32.mrf.mxu0
        %1037 = vmatprep.mubr.bf16.mxu0 0
        %1038 = vmatmul.mubr.bf16.gmra.mxu0 %v846
        %v1039 = vpop.f32.mrf.mxu0
        %v1040 = vadd.f32 %v891, %v1039
        %v1041 = vpop.f32.mrf.mxu0
        %v1042 = vpop.f32.mrf.mxu0
        %v1043 = vadd.f32 %v891, %v1042
        %v1044 = vpop.f32.mrf.mxu0
        %1045 = vmatprep.mubr.bf16.mxu0 0
        %1046 = vmatmul.mubr.bf16.gmra.mxu0 %v847
        %v1047 = vpop.f32.mrf.mxu0
        %v1048 = vadd.f32 %v891, %v1047
        %v1049 = vpop.f32.mrf.mxu0
        %v1050 = vpop.f32.mrf.mxu0
        %v1051 = vadd.f32 %v891, %v1050
        %v1052 = vpop.f32.mrf.mxu0
        %1053 = vmatprep.mubr.bf16.mxu0 0
        %1054 = vmatmul.mubr.bf16.gmra.mxu0 %v848
        %v1055 = vpop.f32.mrf.mxu0
        %v1056 = vadd.f32 %v891, %v1055
        %v1057 = vpop.f32.mrf.mxu0
        %v1058 = vpop.f32.mrf.mxu0
        %v1059 = vadd.f32 %v891, %v1058
        %v1060 = vpop.f32.mrf.mxu0
        %1061 = vmatprep.mubr.bf16.mxu0 0
        %1062 = vmatmul.mubr.bf16.gmra.mxu0 %v849
        %v1063 = vpop.f32.mrf.mxu0
        %v1064 = vadd.f32 %v891, %v1063
        %v1065 = vpop.f32.mrf.mxu0
        %v1066 = vpop.f32.mrf.mxu0
        %v1067 = vadd.f32 %v891, %v1066
        %v1068 = vpop.f32.mrf.mxu0
        %1069 = vmatprep.mubr.bf16.mxu0 0
        %1070 = vmatmul.mubr.bf16.gmra.mxu0 %v850
        %v1071 = vpop.f32.mrf.mxu0
        %v1072 = vadd.f32 %v891, %v1071
        %v1073 = vpop.f32.mrf.mxu0
        %v1074 = vpop.f32.mrf.mxu0
        %v1075 = vadd.f32 %v891, %v1074
        %v1076 = vpop.f32.mrf.mxu0
        %1077 = vmatprep.mubr.bf16.mxu0 0
        %1078 = vmatmul.mubr.bf16.gmra.mxu0 %v851
        %v1079 = vpop.f32.mrf.mxu0
        %v1080 = vadd.f32 %v891, %v1079
        %v1081 = vpop.f32.mrf.mxu0
        %v1082 = vpop.f32.mrf.mxu0
        %v1083 = vadd.f32 %v891, %v1082
        %v1084 = vpop.f32.mrf.mxu0
        %1085 = vmatprep.mubr.bf16.mxu0 0
        %1086 = vmatmul.mubr.bf16.gmra.mxu0 %v852
        %v1087 = vpop.f32.mrf.mxu0
        %v1088 = vadd.f32 %v891, %v1087
        %v1089 = vpop.f32.mrf.mxu0
        %v1090 = vpop.f32.mrf.mxu0
        %v1091 = vadd.f32 %v891, %v1090
        %v1092 = vpop.f32.mrf.mxu0
        %1093 = vmatprep.mubr.bf16.mxu0 0
        %1094 = vmatmul.mubr.bf16.gmra.mxu0 %v853
        %v1095 = vpop.f32.mrf.mxu0
        %v1096 = vadd.f32 %v891, %v1095
        %v1097 = vpop.f32.mrf.mxu0
        %v1098 = vpop.f32.mrf.mxu0
        %v1099 = vadd.f32 %v891, %v1098
        %v1100 = vpop.f32.mrf.mxu0
        %1101 = vmatprep.mubr.bf16.mxu0 0
        %1102 = vmatmul.mubr.bf16.gmra.mxu0 %v854
        %v1103 = vpop.f32.mrf.mxu0
        %v1104 = vadd.f32 %v891, %v1103
        %v1105 = vpop.f32.mrf.mxu0
        %v1106 = vpop.f32.mrf.mxu0
        %v1107 = vadd.f32 %v891, %v1106
        %v1108 = vpop.f32.mrf.mxu0
        %1109 = vmatprep.mubr.bf16.mxu0 0
        %1110 = vmatmul.mubr.bf16.gmra.mxu0 %v855
        %v1111 = vpop.f32.mrf.mxu0
        %v1112 = vadd.f32 %v891, %v1111
        %v1113 = vpop.f32.mrf.mxu0
        %v1114 = vpop.f32.mrf.mxu0
        %v1115 = vadd.f32 %v891, %v1114
        %v1116 = vpop.f32.mrf.mxu0
        %1117 = vmatprep.mubr.bf16.mxu0 0
        %1118 = vmatmul.mubr.bf16.gmra.mxu0 %v856
        %v1119 = vpop.f32.mrf.mxu0
        %v1120 = vadd.f32 %v891, %v1119
        %v1121 = vpop.f32.mrf.mxu0
        %v1122 = vpop.f32.mrf.mxu0
        %v1123 = vadd.f32 %v891, %v1122
        %v1124 = vpop.f32.mrf.mxu0
        %1125 = vmatprep.mubr.bf16.mxu0 0
        %1126 = vmatmul.mubr.bf16.gmra.mxu0 %v857
        %v1127 = vpop.f32.mrf.mxu0
        %v1128 = vadd.f32 %v891, %v1127
        %v1129 = vpop.f32.mrf.mxu0
        %v1130 = vpop.f32.mrf.mxu0
        %v1131 = vadd.f32 %v891, %v1130
        %v1132 = vpop.f32.mrf.mxu0
        %1133 = vmatprep.mubr.bf16.mxu0 0
        %1134 = vmatmul.mubr.bf16.gmra.mxu0 %v858
        %v1135 = vpop.f32.mrf.mxu0
        %v1136 = vadd.f32 %v891, %v1135
        %v1137 = vpop.f32.mrf.mxu0
        %v1138 = vpop.f32.mrf.mxu0
        %v1139 = vadd.f32 %v891, %v1138
        %v1140 = vpop.f32.mrf.mxu0
        %1141 = vmatprep.mubr.bf16.mxu0 0
        %1142 = vmatmul.mubr.bf16.gmra.mxu0 %v859
        %v1143 = vpop.f32.mrf.mxu0
        %v1144 = vadd.f32 %v891, %v1143
        %v1145 = vpop.f32.mrf.mxu0
        %v1146 = vpop.f32.mrf.mxu0
        %v1147 = vadd.f32 %v891, %v1146
        %v1148 = vpop.f32.mrf.mxu0
        %1149 = vmatprep.mubr.bf16.mxu0 0
        %1150 = vmatmul.mubr.bf16.gmra.mxu0 %v860
        %v1151 = vpop.f32.mrf.mxu0
        %v1152 = vadd.f32 %v891, %v1151
        %v1153 = vpop.f32.mrf.mxu0
        %v1154 = vpop.f32.mrf.mxu0
        %v1155 = vadd.f32 %v891, %v1154
        %v1156 = vpop.f32.mrf.mxu0
        %1157 = vmatprep.mubr.bf16.mxu0 0
        %1158 = vmatmul.mubr.bf16.gmra.mxu0 %v861
        %v1159 = vpop.f32.mrf.mxu0
        %v1160 = vadd.f32 %v891, %v1159
        %v1161 = vpop.f32.mrf.mxu0
        %v1162 = vpop.f32.mrf.mxu0
        %v1163 = vadd.f32 %v891, %v1162
        %v1164 = vpop.f32.mrf.mxu0
        %1165 = vmatprep.mubr.bf16.mxu0 0
        %1166 = vmatmul.mubr.bf16.gmra.mxu0 %v862
        %v1167 = vpop.f32.mrf.mxu0
        %v1168 = vadd.f32 %v891, %v1167
        %v1169 = vpop.f32.mrf.mxu0
        %v1170 = vpop.f32.mrf.mxu0
        %v1171 = vadd.f32 %v891, %v1170
        %v1172 = vpop.f32.mrf.mxu0
        %1173 = vmatprep.mubr.bf16.mxu0 0
        %1174 = vmatmul.mubr.bf16.gmra.mxu0 %v863
        %v1175 = vpop.f32.mrf.mxu0
        %v1176 = vadd.f32 %v891, %v1175
        %v1177 = vpop.f32.mrf.mxu0
        %v1178 = vpop.f32.mrf.mxu0
        %v1179 = vadd.f32 %v891, %v1178
        %v1180 = vpop.f32.mrf.mxu0
        %1181 = vmatprep.mubr.bf16.mxu0 0
        %1182 = vmatmul.mubr.bf16.gmra.mxu0 %v864
        %v1183 = vpop.f32.mrf.mxu0
        %v1184 = vadd.f32 %v891, %v1183
        %v1185 = vpop.f32.mrf.mxu0
        %v1186 = vpop.f32.mrf.mxu0
        %v1187 = vadd.f32 %v891, %v1186
        %v1188 = vpop.f32.mrf.mxu0
        %1189 = vmatprep.mubr.bf16.mxu0 0
        %1190 = vmatmul.mubr.bf16.gmra.mxu0 %v865
        %v1191 = vpop.f32.mrf.mxu0
        %v1192 = vadd.f32 %v891, %v1191
        %v1193 = vpop.f32.mrf.mxu0
        %v1194 = vpop.f32.mrf.mxu0
        %v1195 = vadd.f32 %v891, %v1194
        %v1196 = vpop.f32.mrf.mxu0
        %1197 = vmatprep.mubr.bf16.mxu0 0
        %1198 = vmatmul.mubr.bf16.gmra.mxu0 %v866
        %v1199 = vpop.f32.mrf.mxu0
        %v1200 = vadd.f32 %v891, %v1199
        %v1201 = vpop.f32.mrf.mxu0
        %v1202 = vpop.f32.mrf.mxu0
        %v1203 = vadd.f32 %v891, %v1202
        %v1204 = vpop.f32.mrf.mxu0
        %1205 = vmatprep.mubr.bf16.mxu0 0
        %1206 = vmatmul.mubr.bf16.gmra.mxu0 %v867
        %v1207 = vpop.f32.mrf.mxu0
        %v1208 = vadd.f32 %v891, %v1207
        %v1209 = vpop.f32.mrf.mxu0
        %v1210 = vpop.f32.mrf.mxu0
        %v1211 = vadd.f32 %v891, %v1210
        %v1212 = vpop.f32.mrf.mxu0
        %1213 = vmatprep.mubr.bf16.mxu0 0
        %1214 = vmatmul.mubr.bf16.gmra.mxu0 %v868
        %v1215 = vpop.f32.mrf.mxu0
        %v1216 = vadd.f32 %v891, %v1215
        %v1217 = vpop.f32.mrf.mxu0
        %v1218 = vpop.f32.mrf.mxu0
        %v1219 = vadd.f32 %v891, %v1218
        %v1220 = vpop.f32.mrf.mxu0
        %1221 = vmatprep.mubr.bf16.mxu0 0
        %1222 = vmatmul.mubr.bf16.gmra.mxu0 %v869
        %v1223 = vpop.f32.mrf.mxu0
        %v1224 = vadd.f32 %v891, %v1223
        %v1225 = vpop.f32.mrf.mxu0
        %v1226 = vpop.f32.mrf.mxu0
        %v1227 = vadd.f32 %v891, %v1226
        %v1228 = vpop.f32.mrf.mxu0
        %1229 = vdwg.mxu0
        %v1230 = vpack.c.bf16 %v979, %v976
        %v1231 = vpack.c.bf16 %v987, %v984
        %v1232 = vpack.c.bf16 %v995, %v992
        %v1233 = vpack.c.bf16 %v1003, %v1000
        %v1234 = vpack.c.bf16 %v1011, %v1008
        %v1235 = vpack.c.bf16 %v1019, %v1016
        %v1236 = vpack.c.bf16 %v1027, %v1024
        %v1237 = vpack.c.bf16 %v1035, %v1032
        %v1238 = vpack.c.bf16 %v1043, %v1040
        %v1239 = vpack.c.bf16 %v1051, %v1048
        %v1240 = vpack.c.bf16 %v1059, %v1056
        %v1241 = vpack.c.bf16 %v1067, %v1064
        %v1242 = vpack.c.bf16 %v1075, %v1072
        %v1243 = vpack.c.bf16 %v1083, %v1080
        %v1244 = vpack.c.bf16 %v1091, %v1088
        %v1245 = vpack.c.bf16 %v1099, %v1096
        %v1246 = vpack.c.bf16 %v1107, %v1104
        %v1247 = vpack.c.bf16 %v1115, %v1112
        %v1248 = vpack.c.bf16 %v1123, %v1120
        %v1249 = vpack.c.bf16 %v1131, %v1128
        %v1250 = vpack.c.bf16 %v1139, %v1136
        %v1251 = vpack.c.bf16 %v1147, %v1144
        %v1252 = vpack.c.bf16 %v1155, %v1152
        %v1253 = vpack.c.bf16 %v1163, %v1160
        %v1254 = vpack.c.bf16 %v1171, %v1168
        %v1255 = vpack.c.bf16 %v1179, %v1176
        %v1256 = vpack.c.bf16 %v1187, %v1184
        %v1257 = vpack.c.bf16 %v1195, %v1192
        %v1258 = vpack.c.bf16 %v1203, %v1200
        %v1259 = vpack.c.bf16 %v1211, %v1208
        %v1260 = vpack.c.bf16 %v1219, %v1216
        %v1261 = vpack.c.bf16 %v1227, %v1224
        %v1262 = vtanh.bf16.pop %v1230
        %v1263 = vtanh.bf16.pop %v1231
        %v1264 = vtanh.bf16.pop %v1232
        %v1265 = vtanh.bf16.pop %v1233
        %v1266 = vtanh.bf16.pop %v1234
        %v1267 = vtanh.bf16.pop %v1235
        %v1268 = vtanh.bf16.pop %v1236
        %v1269 = vtanh.bf16.pop %v1237
        %v1270 = vtanh.bf16.pop %v1238
        %v1271 = vtanh.bf16.pop %v1239
        %v1272 = vtanh.bf16.pop %v1240
        %v1273 = vtanh.bf16.pop %v1241
        %v1274 = vtanh.bf16.pop %v1242
        %v1275 = vtanh.bf16.pop %v1243
        %v1276 = vtanh.bf16.pop %v1244
        %v1277 = vtanh.bf16.pop %v1245
        %v1278 = vtanh.bf16.pop %v1246
        %v1279 = vtanh.bf16.pop %v1247
        %v1280 = vtanh.bf16.pop %v1248
        %v1281 = vtanh.bf16.pop %v1249
        %v1282 = vtanh.bf16.pop %v1250
        %v1283 = vtanh.bf16.pop %v1251
        %v1284 = vtanh.bf16.pop %v1252
        %v1285 = vtanh.bf16.pop %v1253
        %v1286 = vtanh.bf16.pop %v1254
        %v1287 = vtanh.bf16.pop %v1255
        %v1288 = vtanh.bf16.pop %v1256
        %v1289 = vtanh.bf16.pop %v1257
        %v1290 = vtanh.bf16.pop %v1258
        %v1291 = vtanh.bf16.pop %v1259
        %v1292 = vtanh.bf16.pop %v1260
        %v1293 = vtanh.bf16.pop %v1261
        %v1294 = vld [vmem:[%s5] sm:$0xf]
        %v1295 = vld [vmem:[%s5 + $0x4] sm:$0xf]
        %v1296 = vld [vmem:[%s5 + $0x8] sm:$0xf]
        %v1297 = vld [vmem:[%s5 + $0xc] sm:$0xf]
        %v1298 = vld [vmem:[%s5 + $0x10] sm:$0xf]
        %v1299 = vld [vmem:[%s5 + $0x14] sm:$0xf]
        %v1300 = vld [vmem:[%s5 + $0x18] sm:$0xf]
        %v1301 = vld [vmem:[%s5 + $0x1c] sm:$0xf]
        %v1302 = vld [vmem:[%s5 + $0x20] sm:$0xf]
        %v1303 = vld [vmem:[%s5 + $0x24] sm:$0xf]
        %v1304 = vld [vmem:[%s5 + $0x28] sm:$0xf]
        %v1305 = vld [vmem:[%s5 + $0x2c] sm:$0xf]
        %v1306 = vld [vmem:[%s5 + $0x30] sm:$0xf]
        %v1307 = vld [vmem:[%s5 + $0x34] sm:$0xf]
        %v1308 = vld [vmem:[%s5 + $0x38] sm:$0xf]
        %v1309 = vld [vmem:[%s5 + $0x3c] sm:$0xf]
        %v1310 = vld [vmem:[%s6] sm:$0x1]
        %v1312 = vlaneseq
        %v1313 = vshrl.u32 %v1312, 7
        %v1314 = vsub.s32 0, %v1313
        %v1315 = vrot.slane %v1310, %v1314
        %v1333 = vunpack.c.l.b16 %v1294
        %v1334 = vunpack.c.l.b16 %v1295
        %v1335 = vunpack.c.l.b16 %v1296
        %v1336 = vunpack.c.l.b16 %v1297
        %v1337 = vunpack.c.l.b16 %v1298
        %v1338 = vunpack.c.l.b16 %v1299
        %v1339 = vunpack.c.l.b16 %v1300
        %v1340 = vunpack.c.l.b16 %v1301
        %v1341 = vunpack.c.l.b16 %v1302
        %v1342 = vunpack.c.l.b16 %v1303
        %v1343 = vunpack.c.l.b16 %v1304
        %v1344 = vunpack.c.l.b16 %v1305
        %v1345 = vunpack.c.l.b16 %v1306
        %v1346 = vunpack.c.l.b16 %v1307
        %v1347 = vunpack.c.l.b16 %v1308
        %v1348 = vunpack.c.l.b16 %v1309
        %v1349 = vpack.c.b16 %v1334, %v1333
        %v1350 = vpack.c.b16 %v1336, %v1335
        %v1351 = vpack.c.b16 %v1338, %v1337
        %v1352 = vpack.c.b16 %v1340, %v1339
        %v1353 = vpack.c.b16 %v1342, %v1341
        %v1354 = vpack.c.b16 %v1344, %v1343
        %v1355 = vpack.c.b16 %v1346, %v1345
        %v1356 = vpack.c.b16 %v1348, %v1347
        %1365 = vmatprep.subr.bf16.mxu0 0
        %1366 = vmatpush1.bf16.msra.mxu0 %v1356
        %1367 = vmatprep.subr.bf16.mxu0 0
        %1368 = vmatpush1.bf16.msra.mxu0 %v1355
        %1369 = vmatprep.subr.bf16.mxu0 0
        %1370 = vmatpush1.bf16.msra.mxu0 %v1354
        %1371 = vmatprep.subr.bf16.mxu0 0
        %1372 = vmatpush1.bf16.msra.mxu0 %v1353
        %1373 = vmatprep.subr.bf16.mxu0 0
        %1374 = vmatpush1.bf16.msra.mxu0 %v1352
        %1375 = vmatprep.subr.bf16.mxu0 0
        %1376 = vmatpush1.bf16.msra.mxu0 %v1351
        %1377 = vmatprep.subr.bf16.mxu0 0
        %1378 = vmatpush1.bf16.msra.mxu0 %v1350
        %1379 = vmatprep.subr.bf16.mxu0 0
        %1380 = vmatpush1.bf16.msra.mxu0 %v1349
        %1381 = vmatprep.subr.bf16.mxu0 0
        %1382 = vmatpush2.bf16.msra.mxu0 0
        %1383 = vmatprep.subr.bf16.mxu0 0
        %1384 = vmatpush2.bf16.msra.mxu0 0
        %1385 = vmatprep.subr.bf16.mxu0 0
        %1386 = vmatpush2.bf16.msra.mxu0 0
        %1387 = vmatprep.subr.bf16.mxu0 0
        %1388 = vmatpush2.bf16.msra.mxu0 0
        %1389 = vmatprep.subr.bf16.mxu0 0
        %1390 = vmatpush2.bf16.msra.mxu0 0
        %1391 = vmatprep.subr.bf16.mxu0 0
        %1392 = vmatpush2.bf16.msra.mxu0 0
        %1393 = vmatprep.subr.bf16.mxu0 0
        %1394 = vmatpush2.bf16.msra.mxu0 0
        %1395 = vmatprep.subr.bf16.mxu0 0
        %1396 = vmatpush2.bf16.msra.mxu0 0
        %1397 = vmatprep.mubr.bf16.mxu0 0
        %1398 = vmatmul.mubr.bf16.gmra.mxu0 %v1262
        %v1399 = vpop.f32.mrf.mxu0
        %v1400 = vadd.f32 %v1315, %v1399
        %v1401 = vpop.f32.mrf.mxu0
        %v1402 = vpop.f32.mrf.mxu0
        %v1403 = vadd.f32 %v1315, %v1402
        %v1404 = vpop.f32.mrf.mxu0
        %1405 = vmatprep.mubr.bf16.mxu0 0
        %1406 = vmatmul.mubr.bf16.gmra.mxu0 %v1263
        %v1407 = vpop.f32.mrf.mxu0
        %v1408 = vadd.f32 %v1315, %v1407
        %v1409 = vpop.f32.mrf.mxu0
        %v1410 = vpop.f32.mrf.mxu0
        %v1411 = vadd.f32 %v1315, %v1410
        %v1412 = vpop.f32.mrf.mxu0
        %1413 = vmatprep.mubr.bf16.mxu0 0
        %1414 = vmatmul.mubr.bf16.gmra.mxu0 %v1264
        %v1415 = vpop.f32.mrf.mxu0
        %v1416 = vadd.f32 %v1315, %v1415
        %v1417 = vpop.f32.mrf.mxu0
        %v1418 = vpop.f32.mrf.mxu0
        %v1419 = vadd.f32 %v1315, %v1418
        %v1420 = vpop.f32.mrf.mxu0
        %1421 = vmatprep.mubr.bf16.mxu0 0
        %1422 = vmatmul.mubr.bf16.gmra.mxu0 %v1265
        %v1423 = vpop.f32.mrf.mxu0
        %v1424 = vadd.f32 %v1315, %v1423
        %v1425 = vpop.f32.mrf.mxu0
        %v1426 = vpop.f32.mrf.mxu0
        %v1427 = vadd.f32 %v1315, %v1426
        %v1428 = vpop.f32.mrf.mxu0
        %1429 = vmatprep.mubr.bf16.mxu0 0
        %1430 = vmatmul.mubr.bf16.gmra.mxu0 %v1266
        %v1431 = vpop.f32.mrf.mxu0
        %v1432 = vadd.f32 %v1315, %v1431
        %v1433 = vpop.f32.mrf.mxu0
        %v1434 = vpop.f32.mrf.mxu0
        %v1435 = vadd.f32 %v1315, %v1434
        %v1436 = vpop.f32.mrf.mxu0
        %1437 = vmatprep.mubr.bf16.mxu0 0
        %1438 = vmatmul.mubr.bf16.gmra.mxu0 %v1267
        %v1439 = vpop.f32.mrf.mxu0
        %v1440 = vadd.f32 %v1315, %v1439
        %v1441 = vpop.f32.mrf.mxu0
        %v1442 = vpop.f32.mrf.mxu0
        %v1443 = vadd.f32 %v1315, %v1442
        %v1444 = vpop.f32.mrf.mxu0
        %1445 = vmatprep.mubr.bf16.mxu0 0
        %1446 = vmatmul.mubr.bf16.gmra.mxu0 %v1268
        %v1447 = vpop.f32.mrf.mxu0
        %v1448 = vadd.f32 %v1315, %v1447
        %v1449 = vpop.f32.mrf.mxu0
        %v1450 = vpop.f32.mrf.mxu0
        %v1451 = vadd.f32 %v1315, %v1450
        %v1452 = vpop.f32.mrf.mxu0
        %1453 = vmatprep.mubr.bf16.mxu0 0
        %1454 = vmatmul.mubr.bf16.gmra.mxu0 %v1269
        %v1455 = vpop.f32.mrf.mxu0
        %v1456 = vadd.f32 %v1315, %v1455
        %v1457 = vpop.f32.mrf.mxu0
        %v1458 = vpop.f32.mrf.mxu0
        %v1459 = vadd.f32 %v1315, %v1458
        %v1460 = vpop.f32.mrf.mxu0
        %1461 = vmatprep.mubr.bf16.mxu0 0
        %1462 = vmatmul.mubr.bf16.gmra.mxu0 %v1270
        %v1463 = vpop.f32.mrf.mxu0
        %v1464 = vadd.f32 %v1315, %v1463
        %v1465 = vpop.f32.mrf.mxu0
        %v1466 = vpop.f32.mrf.mxu0
        %v1467 = vadd.f32 %v1315, %v1466
        %v1468 = vpop.f32.mrf.mxu0
        %1469 = vmatprep.mubr.bf16.mxu0 0
        %1470 = vmatmul.mubr.bf16.gmra.mxu0 %v1271
        %v1471 = vpop.f32.mrf.mxu0
        %v1472 = vadd.f32 %v1315, %v1471
        %v1473 = vpop.f32.mrf.mxu0
        %v1474 = vpop.f32.mrf.mxu0
        %v1475 = vadd.f32 %v1315, %v1474
        %v1476 = vpop.f32.mrf.mxu0
        %1477 = vmatprep.mubr.bf16.mxu0 0
        %1478 = vmatmul.mubr.bf16.gmra.mxu0 %v1272
        %v1479 = vpop.f32.mrf.mxu0
        %v1480 = vadd.f32 %v1315, %v1479
        %v1481 = vpop.f32.mrf.mxu0
        %v1482 = vpop.f32.mrf.mxu0
        %v1483 = vadd.f32 %v1315, %v1482
        %v1484 = vpop.f32.mrf.mxu0
        %1485 = vmatprep.mubr.bf16.mxu0 0
        %1486 = vmatmul.mubr.bf16.gmra.mxu0 %v1273
        %v1487 = vpop.f32.mrf.mxu0
        %v1488 = vadd.f32 %v1315, %v1487
        %v1489 = vpop.f32.mrf.mxu0
        %v1490 = vpop.f32.mrf.mxu0
        %v1491 = vadd.f32 %v1315, %v1490
        %v1492 = vpop.f32.mrf.mxu0
        %1493 = vmatprep.mubr.bf16.mxu0 0
        %1494 = vmatmul.mubr.bf16.gmra.mxu0 %v1274
        %v1495 = vpop.f32.mrf.mxu0
        %v1496 = vadd.f32 %v1315, %v1495
        %v1497 = vpop.f32.mrf.mxu0
        %v1498 = vpop.f32.mrf.mxu0
        %v1499 = vadd.f32 %v1315, %v1498
        %v1500 = vpop.f32.mrf.mxu0
        %1501 = vmatprep.mubr.bf16.mxu0 0
        %1502 = vmatmul.mubr.bf16.gmra.mxu0 %v1275
        %v1503 = vpop.f32.mrf.mxu0
        %v1504 = vadd.f32 %v1315, %v1503
        %v1505 = vpop.f32.mrf.mxu0
        %v1506 = vpop.f32.mrf.mxu0
        %v1507 = vadd.f32 %v1315, %v1506
        %v1508 = vpop.f32.mrf.mxu0
        %1509 = vmatprep.mubr.bf16.mxu0 0
        %1510 = vmatmul.mubr.bf16.gmra.mxu0 %v1276
        %v1511 = vpop.f32.mrf.mxu0
        %v1512 = vadd.f32 %v1315, %v1511
        %v1513 = vpop.f32.mrf.mxu0
        %v1514 = vpop.f32.mrf.mxu0
        %v1515 = vadd.f32 %v1315, %v1514
        %v1516 = vpop.f32.mrf.mxu0
        %1517 = vmatprep.mubr.bf16.mxu0 0
        %1518 = vmatmul.mubr.bf16.gmra.mxu0 %v1277
        %v1519 = vpop.f32.mrf.mxu0
        %v1520 = vadd.f32 %v1315, %v1519
        %v1521 = vpop.f32.mrf.mxu0
        %v1522 = vpop.f32.mrf.mxu0
        %v1523 = vadd.f32 %v1315, %v1522
        %v1524 = vpop.f32.mrf.mxu0
        %1525 = vmatprep.mubr.bf16.mxu0 0
        %1526 = vmatmul.mubr.bf16.gmra.mxu0 %v1278
        %v1527 = vpop.f32.mrf.mxu0
        %v1528 = vadd.f32 %v1315, %v1527
        %v1529 = vpop.f32.mrf.mxu0
        %v1530 = vpop.f32.mrf.mxu0
        %v1531 = vadd.f32 %v1315, %v1530
        %v1532 = vpop.f32.mrf.mxu0
        %1533 = vmatprep.mubr.bf16.mxu0 0
        %1534 = vmatmul.mubr.bf16.gmra.mxu0 %v1279
        %v1535 = vpop.f32.mrf.mxu0
        %v1536 = vadd.f32 %v1315, %v1535
        %v1537 = vpop.f32.mrf.mxu0
        %v1538 = vpop.f32.mrf.mxu0
        %v1539 = vadd.f32 %v1315, %v1538
        %v1540 = vpop.f32.mrf.mxu0
        %1541 = vmatprep.mubr.bf16.mxu0 0
        %1542 = vmatmul.mubr.bf16.gmra.mxu0 %v1280
        %v1543 = vpop.f32.mrf.mxu0
        %v1544 = vadd.f32 %v1315, %v1543
        %v1545 = vpop.f32.mrf.mxu0
        %v1546 = vpop.f32.mrf.mxu0
        %v1547 = vadd.f32 %v1315, %v1546
        %v1548 = vpop.f32.mrf.mxu0
        %1549 = vmatprep.mubr.bf16.mxu0 0
        %1550 = vmatmul.mubr.bf16.gmra.mxu0 %v1281
        %v1551 = vpop.f32.mrf.mxu0
        %v1552 = vadd.f32 %v1315, %v1551
        %v1553 = vpop.f32.mrf.mxu0
        %v1554 = vpop.f32.mrf.mxu0
        %v1555 = vadd.f32 %v1315, %v1554
        %v1556 = vpop.f32.mrf.mxu0
        %1557 = vmatprep.mubr.bf16.mxu0 0
        %1558 = vmatmul.mubr.bf16.gmra.mxu0 %v1282
        %v1559 = vpop.f32.mrf.mxu0
        %v1560 = vadd.f32 %v1315, %v1559
        %v1561 = vpop.f32.mrf.mxu0
        %v1562 = vpop.f32.mrf.mxu0
        %v1563 = vadd.f32 %v1315, %v1562
        %v1564 = vpop.f32.mrf.mxu0
        %1565 = vmatprep.mubr.bf16.mxu0 0
        %1566 = vmatmul.mubr.bf16.gmra.mxu0 %v1283
        %v1567 = vpop.f32.mrf.mxu0
        %v1568 = vadd.f32 %v1315, %v1567
        %v1569 = vpop.f32.mrf.mxu0
        %v1570 = vpop.f32.mrf.mxu0
        %v1571 = vadd.f32 %v1315, %v1570
        %v1572 = vpop.f32.mrf.mxu0
        %1573 = vmatprep.mubr.bf16.mxu0 0
        %1574 = vmatmul.mubr.bf16.gmra.mxu0 %v1284
        %v1575 = vpop.f32.mrf.mxu0
        %v1576 = vadd.f32 %v1315, %v1575
        %v1577 = vpop.f32.mrf.mxu0
        %v1578 = vpop.f32.mrf.mxu0
        %v1579 = vadd.f32 %v1315, %v1578
        %v1580 = vpop.f32.mrf.mxu0
        %1581 = vmatprep.mubr.bf16.mxu0 0
        %1582 = vmatmul.mubr.bf16.gmra.mxu0 %v1285
        %v1583 = vpop.f32.mrf.mxu0
        %v1584 = vadd.f32 %v1315, %v1583
        %v1585 = vpop.f32.mrf.mxu0
        %v1586 = vpop.f32.mrf.mxu0
        %v1587 = vadd.f32 %v1315, %v1586
        %v1588 = vpop.f32.mrf.mxu0
        %1589 = vmatprep.mubr.bf16.mxu0 0
        %1590 = vmatmul.mubr.bf16.gmra.mxu0 %v1286
        %v1591 = vpop.f32.mrf.mxu0
        %v1592 = vadd.f32 %v1315, %v1591
        %v1593 = vpop.f32.mrf.mxu0
        %v1594 = vpop.f32.mrf.mxu0
        %v1595 = vadd.f32 %v1315, %v1594
        %v1596 = vpop.f32.mrf.mxu0
        %1597 = vmatprep.mubr.bf16.mxu0 0
        %1598 = vmatmul.mubr.bf16.gmra.mxu0 %v1287
        %v1599 = vpop.f32.mrf.mxu0
        %v1600 = vadd.f32 %v1315, %v1599
        %v1601 = vpop.f32.mrf.mxu0
        %v1602 = vpop.f32.mrf.mxu0
        %v1603 = vadd.f32 %v1315, %v1602
        %v1604 = vpop.f32.mrf.mxu0
        %1605 = vmatprep.mubr.bf16.mxu0 0
        %1606 = vmatmul.mubr.bf16.gmra.mxu0 %v1288
        %v1607 = vpop.f32.mrf.mxu0
        %v1608 = vadd.f32 %v1315, %v1607
        %v1609 = vpop.f32.mrf.mxu0
        %v1610 = vpop.f32.mrf.mxu0
        %v1611 = vadd.f32 %v1315, %v1610
        %v1612 = vpop.f32.mrf.mxu0
        %1613 = vmatprep.mubr.bf16.mxu0 0
        %1614 = vmatmul.mubr.bf16.gmra.mxu0 %v1289
        %v1615 = vpop.f32.mrf.mxu0
        %v1616 = vadd.f32 %v1315, %v1615
        %v1617 = vpop.f32.mrf.mxu0
        %v1618 = vpop.f32.mrf.mxu0
        %v1619 = vadd.f32 %v1315, %v1618
        %v1620 = vpop.f32.mrf.mxu0
        %1621 = vmatprep.mubr.bf16.mxu0 0
        %1622 = vmatmul.mubr.bf16.gmra.mxu0 %v1290
        %v1623 = vpop.f32.mrf.mxu0
        %v1624 = vadd.f32 %v1315, %v1623
        %v1625 = vpop.f32.mrf.mxu0
        %v1626 = vpop.f32.mrf.mxu0
        %v1627 = vadd.f32 %v1315, %v1626
        %v1628 = vpop.f32.mrf.mxu0
        %1629 = vmatprep.mubr.bf16.mxu0 0
        %1630 = vmatmul.mubr.bf16.gmra.mxu0 %v1291
        %v1631 = vpop.f32.mrf.mxu0
        %v1632 = vadd.f32 %v1315, %v1631
        %v1633 = vpop.f32.mrf.mxu0
        %v1634 = vpop.f32.mrf.mxu0
        %v1635 = vadd.f32 %v1315, %v1634
        %v1636 = vpop.f32.mrf.mxu0
        %1637 = vmatprep.mubr.bf16.mxu0 0
        %1638 = vmatmul.mubr.bf16.gmra.mxu0 %v1292
        %v1639 = vpop.f32.mrf.mxu0
        %v1640 = vadd.f32 %v1315, %v1639
        %v1641 = vpop.f32.mrf.mxu0
        %v1642 = vpop.f32.mrf.mxu0
        %v1643 = vadd.f32 %v1315, %v1642
        %v1644 = vpop.f32.mrf.mxu0
        %1645 = vmatprep.mubr.bf16.mxu0 0
        %1646 = vmatmul.mubr.bf16.gmra.mxu0 %v1293
        %v1647 = vpop.f32.mrf.mxu0
        %v1648 = vadd.f32 %v1315, %v1647
        %v1649 = vpop.f32.mrf.mxu0
        %v1650 = vpop.f32.mrf.mxu0
        %v1651 = vadd.f32 %v1315, %v1650
        %v1652 = vpop.f32.mrf.mxu0
        %1653 = vdwg.mxu0
        %vm1654 = vcmask 130048
        %1655 = vst.msk [vmem:[%s280] sm:$0xff] %vm1654, %v1400
        %1656 = vst.msk [vmem:[%s280 + $0x8] sm:$0xff] %vm1654, %v1403
        %1657 = vst.msk [vmem:[%s280 + $0x10] sm:$0xff] %vm1654, %v1408
        %1658 = vst.msk [vmem:[%s280 + $0x18] sm:$0xff] %vm1654, %v1411
        %1659 = vst.msk [vmem:[%s280 + $0x20] sm:$0xff] %vm1654, %v1416
        %1660 = vst.msk [vmem:[%s280 + $0x28] sm:$0xff] %vm1654, %v1419
        %1661 = vst.msk [vmem:[%s280 + $0x30] sm:$0xff] %vm1654, %v1424
        %1662 = vst.msk [vmem:[%s280 + $0x38] sm:$0xff] %vm1654, %v1427
        %1663 = vst.msk [vmem:[%s280 + $0x40] sm:$0xff] %vm1654, %v1432
        %1664 = vst.msk [vmem:[%s280 + $0x48] sm:$0xff] %vm1654, %v1435
        %1665 = vst.msk [vmem:[%s280 + $0x50] sm:$0xff] %vm1654, %v1440
        %1666 = vst.msk [vmem:[%s280 + $0x58] sm:$0xff] %vm1654, %v1443
        %1667 = vst.msk [vmem:[%s280 + $0x60] sm:$0xff] %vm1654, %v1448
        %1668 = vst.msk [vmem:[%s280 + $0x68] sm:$0xff] %vm1654, %v1451
        %1669 = vst.msk [vmem:[%s280 + $0x70] sm:$0xff] %vm1654, %v1456
        %1670 = vst.msk [vmem:[%s280 + $0x78] sm:$0xff] %vm1654, %v1459
        %1671 = vst.msk [vmem:[%s280 + $0x80] sm:$0xff] %vm1654, %v1464
        %1672 = vst.msk [vmem:[%s280 + $0x88] sm:$0xff] %vm1654, %v1467
        %1673 = vst.msk [vmem:[%s280 + $0x90] sm:$0xff] %vm1654, %v1472
        %1674 = vst.msk [vmem:[%s280 + $0x98] sm:$0xff] %vm1654, %v1475
        %1675 = vst.msk [vmem:[%s280 + $0xa0] sm:$0xff] %vm1654, %v1480
        %1676 = vst.msk [vmem:[%s280 + $0xa8] sm:$0xff] %vm1654, %v1483
        %1677 = vst.msk [vmem:[%s280 + $0xb0] sm:$0xff] %vm1654, %v1488
        %1678 = vst.msk [vmem:[%s280 + $0xb8] sm:$0xff] %vm1654, %v1491
        %1679 = vst.msk [vmem:[%s280 + $0xc0] sm:$0xff] %vm1654, %v1496
        %1680 = vst.msk [vmem:[%s280 + $0xc8] sm:$0xff] %vm1654, %v1499
        %1681 = vst.msk [vmem:[%s280 + $0xd0] sm:$0xff] %vm1654, %v1504
        %1682 = vst.msk [vmem:[%s280 + $0xd8] sm:$0xff] %vm1654, %v1507
        %1683 = vst.msk [vmem:[%s280 + $0xe0] sm:$0xff] %vm1654, %v1512
        %1684 = vst.msk [vmem:[%s280 + $0xe8] sm:$0xff] %vm1654, %v1515
        %1685 = vst.msk [vmem:[%s280 + $0xf0] sm:$0xff] %vm1654, %v1520
        %1686 = vst.msk [vmem:[%s280 + $0xf8] sm:$0xff] %vm1654, %v1523
        %1687 = vst.msk [vmem:[%s280 + $0x100] sm:$0xff] %vm1654, %v1528
        %1688 = vst.msk [vmem:[%s280 + $0x108] sm:$0xff] %vm1654, %v1531
        %1689 = vst.msk [vmem:[%s280 + $0x110] sm:$0xff] %vm1654, %v1536
        %1690 = vst.msk [vmem:[%s280 + $0x118] sm:$0xff] %vm1654, %v1539
        %1691 = vst.msk [vmem:[%s280 + $0x120] sm:$0xff] %vm1654, %v1544
        %1692 = vst.msk [vmem:[%s280 + $0x128] sm:$0xff] %vm1654, %v1547
        %1693 = vst.msk [vmem:[%s280 + $0x130] sm:$0xff] %vm1654, %v1552
        %1694 = vst.msk [vmem:[%s280 + $0x138] sm:$0xff] %vm1654, %v1555
        %1695 = vst.msk [vmem:[%s280 + $0x140] sm:$0xff] %vm1654, %v1560
        %1696 = vst.msk [vmem:[%s280 + $0x148] sm:$0xff] %vm1654, %v1563
        %1697 = vst.msk [vmem:[%s280 + $0x150] sm:$0xff] %vm1654, %v1568
        %1698 = vst.msk [vmem:[%s280 + $0x158] sm:$0xff] %vm1654, %v1571
        %1699 = vst.msk [vmem:[%s280 + $0x160] sm:$0xff] %vm1654, %v1576
        %1700 = vst.msk [vmem:[%s280 + $0x168] sm:$0xff] %vm1654, %v1579
        %1701 = vst.msk [vmem:[%s280 + $0x170] sm:$0xff] %vm1654, %v1584
        %1702 = vst.msk [vmem:[%s280 + $0x178] sm:$0xff] %vm1654, %v1587
        %1703 = vst.msk [vmem:[%s280 + $0x180] sm:$0xff] %vm1654, %v1592
        %1704 = vst.msk [vmem:[%s280 + $0x188] sm:$0xff] %vm1654, %v1595
        %1705 = vst.msk [vmem:[%s280 + $0x190] sm:$0xff] %vm1654, %v1600
        %1706 = vst.msk [vmem:[%s280 + $0x198] sm:$0xff] %vm1654, %v1603
        %1707 = vst.msk [vmem:[%s280 + $0x1a0] sm:$0xff] %vm1654, %v1608
        %1708 = vst.msk [vmem:[%s280 + $0x1a8] sm:$0xff] %vm1654, %v1611
        %1709 = vst.msk [vmem:[%s280 + $0x1b0] sm:$0xff] %vm1654, %v1616
        %1710 = vst.msk [vmem:[%s280 + $0x1b8] sm:$0xff] %vm1654, %v1619
        %1711 = vst.msk [vmem:[%s280 + $0x1c0] sm:$0xff] %vm1654, %v1624
        %1712 = vst.msk [vmem:[%s280 + $0x1c8] sm:$0xff] %vm1654, %v1627
        %1713 = vst.msk [vmem:[%s280 + $0x1d0] sm:$0xff] %vm1654, %v1632
        %1714 = vst.msk [vmem:[%s280 + $0x1d8] sm:$0xff] %vm1654, %v1635
        %1715 = vst.msk [vmem:[%s280 + $0x1e0] sm:$0xff] %vm1654, %v1640
        %1716 = vst.msk [vmem:[%s280 + $0x1e8] sm:$0xff] %vm1654, %v1643
        %1717 = vst.msk [vmem:[%s280 + $0x1f0] sm:$0xff] %vm1654, %v1648
        %1718 = vst.msk [vmem:[%s280 + $0x1f8] sm:$0xff] %vm1654, %v1651
        %s1719 = sand.u32 %s178, 1
        %s1720 = sand.u32 %s178, 1
        %s1721 = smul.addr %s1720, 512
        %s1722 = scalar_lea.vmem [#allocation2], %s1721
        // Predicated region
        $region49: #{tpu_custom_call.1} parent=47 // pred_check
          %p1723 = pneg %p188
        $region50: #{tpu_custom_call.1} parent=47 // pred_check_branch
          %1725 = sbr.rel (%p1723) target = $region52
        $region51: #{tpu_custom_call.1} parent=47 // pred_region
          %s1726 = smul.u32 64, %s18
          %s1727 = ssub.s32 250, %s1726
          %p1728 = scmp.lt.s32.totalorder %s1727, 64
          %s1729 = scalar_select %p1728, %s1727, 64
          %s1730 = smul.u32 128, %s1729
          %p1731 = scmp.ne.s32.totalorder 0, %s1730
          %s1732 = smul.addr %s1726, 8
          %s1733 = scalar_lea.vmem %s7, %s1732
          // Predicated region
          $region53: #{tpu_custom_call.1} parent=51 // pred_check
            %p1734 = pneg %p1731
          $region54: #{tpu_custom_call.1} parent=51 // pred_check_branch
            %1736 = sbr.rel (%p1734) target = $region56
          $region55: #{tpu_custom_call.1} parent=51 // pred_region
            // Predicated region
            $region57: #{tpu_custom_call.1} parent=55 // pred_check
              _
            $region58: #{tpu_custom_call.1} parent=55 // pred_check_branch
              %1738 = sbr.rel (0) target = $region60
            $region59: #{tpu_custom_call.1} parent=55 // pred_region
              // Predicated region
              $region79: #{tpu_custom_call.1} parent=59 // pred_check
                _
              $region80: #{tpu_custom_call.1} parent=59 // pred_check_branch
                %1914 = sbr.rel (0) target = $region82
              $region81: #{tpu_custom_call.1} parent=59 // pred_region
                %s1915 = sshrl.u32 %s1729, 6
                // While loop
                $region83: #{tpu_custom_call.1} parent=81 // loop_pre_header
                  _
                $region84: #{tpu_custom_call.1} parent=81 // loop_header
                  %s1917 = sphi 0, %s1919
                  %p1918 = scmp.ge.s32.totalorder %s1917, %s1915
                  %s1922 = sphi 0, %s2055
                  %s1923 = sphi %s1722, %s2058
                  %s1924 = sphi %s1733, %s2059
                $region85: #{tpu_custom_call.1} parent=81 // loop_header_branch
                  %1921 = sbr.rel (%p1918) target = $region89
                $region86: #{tpu_custom_call.1} parent=81 // loop_body
                  %v1925 = vld [vmem:[%s1923] sm:$0xff]
                  %1926 = vst [vmem:[%s1924] sm:$0xff] %v1925
                  %v1927 = vld [vmem:[%s1923 + $0x8] sm:$0xff]
                  %1928 = vst [vmem:[%s1924 + $0x8] sm:$0xff] %v1927
                  %v1929 = vld [vmem:[%s1923 + $0x10] sm:$0xff]
                  %1930 = vst [vmem:[%s1924 + $0x10] sm:$0xff] %v1929
                  %v1931 = vld [vmem:[%s1923 + $0x18] sm:$0xff]
                  %1932 = vst [vmem:[%s1924 + $0x18] sm:$0xff] %v1931
                  %v1933 = vld [vmem:[%s1923 + $0x20] sm:$0xff]
                  %1934 = vst [vmem:[%s1924 + $0x20] sm:$0xff] %v1933
                  %v1935 = vld [vmem:[%s1923 + $0x28] sm:$0xff]
                  %1936 = vst [vmem:[%s1924 + $0x28] sm:$0xff] %v1935
                  %v1937 = vld [vmem:[%s1923 + $0x30] sm:$0xff]
                  %1938 = vst [vmem:[%s1924 + $0x30] sm:$0xff] %v1937
                  %v1939 = vld [vmem:[%s1923 + $0x38] sm:$0xff]
                  %1940 = vst [vmem:[%s1924 + $0x38] sm:$0xff] %v1939
                  %v1941 = vld [vmem:[%s1923 + $0x40] sm:$0xff]
                  %1942 = vst [vmem:[%s1924 + $0x40] sm:$0xff] %v1941
                  %v1943 = vld [vmem:[%s1923 + $0x48] sm:$0xff]
                  %1944 = vst [vmem:[%s1924 + $0x48] sm:$0xff] %v1943
                  %v1945 = vld [vmem:[%s1923 + $0x50] sm:$0xff]
                  %1946 = vst [vmem:[%s1924 + $0x50] sm:$0xff] %v1945
                  %v1947 = vld [vmem:[%s1923 + $0x58] sm:$0xff]
                  %1948 = vst [vmem:[%s1924 + $0x58] sm:$0xff] %v1947
                  %v1949 = vld [vmem:[%s1923 + $0x60] sm:$0xff]
                  %1950 = vst [vmem:[%s1924 + $0x60] sm:$0xff] %v1949
                  %v1951 = vld [vmem:[%s1923 + $0x68] sm:$0xff]
                  %1952 = vst [vmem:[%s1924 + $0x68] sm:$0xff] %v1951
                  %v1953 = vld [vmem:[%s1923 + $0x70] sm:$0xff]
                  %1954 = vst [vmem:[%s1924 + $0x70] sm:$0xff] %v1953
                  %v1955 = vld [vmem:[%s1923 + $0x78] sm:$0xff]
                  %1956 = vst [vmem:[%s1924 + $0x78] sm:$0xff] %v1955
                  %v1957 = vld [vmem:[%s1923 + $0x80] sm:$0xff]
                  %1958 = vst [vmem:[%s1924 + $0x80] sm:$0xff] %v1957
                  %v1959 = vld [vmem:[%s1923 + $0x88] sm:$0xff]
                  %1960 = vst [vmem:[%s1924 + $0x88] sm:$0xff] %v1959
                  %v1961 = vld [vmem:[%s1923 + $0x90] sm:$0xff]
                  %1962 = vst [vmem:[%s1924 + $0x90] sm:$0xff] %v1961
                  %v1963 = vld [vmem:[%s1923 + $0x98] sm:$0xff]
                  %1964 = vst [vmem:[%s1924 + $0x98] sm:$0xff] %v1963
                  %v1965 = vld [vmem:[%s1923 + $0xa0] sm:$0xff]
                  %1966 = vst [vmem:[%s1924 + $0xa0] sm:$0xff] %v1965
                  %v1967 = vld [vmem:[%s1923 + $0xa8] sm:$0xff]
                  %1968 = vst [vmem:[%s1924 + $0xa8] sm:$0xff] %v1967
                  %v1969 = vld [vmem:[%s1923 + $0xb0] sm:$0xff]
                  %1970 = vst [vmem:[%s1924 + $0xb0] sm:$0xff] %v1969
                  %v1971 = vld [vmem:[%s1923 + $0xb8] sm:$0xff]
                  %1972 = vst [vmem:[%s1924 + $0xb8] sm:$0xff] %v1971
                  %v1973 = vld [vmem:[%s1923 + $0xc0] sm:$0xff]
                  %1974 = vst [vmem:[%s1924 + $0xc0] sm:$0xff] %v1973
                  %v1975 = vld [vmem:[%s1923 + $0xc8] sm:$0xff]
                  %1976 = vst [vmem:[%s1924 + $0xc8] sm:$0xff] %v1975
                  %v1977 = vld [vmem:[%s1923 + $0xd0] sm:$0xff]
                  %1978 = vst [vmem:[%s1924 + $0xd0] sm:$0xff] %v1977
                  %v1979 = vld [vmem:[%s1923 + $0xd8] sm:$0xff]
                  %1980 = vst [vmem:[%s1924 + $0xd8] sm:$0xff] %v1979
                  %v1981 = vld [vmem:[%s1923 + $0xe0] sm:$0xff]
                  %1982 = vst [vmem:[%s1924 + $0xe0] sm:$0xff] %v1981
                  %v1983 = vld [vmem:[%s1923 + $0xe8] sm:$0xff]
                  %1984 = vst [vmem:[%s1924 + $0xe8] sm:$0xff] %v1983
                  %v1985 = vld [vmem:[%s1923 + $0xf0] sm:$0xff]
                  %1986 = vst [vmem:[%s1924 + $0xf0] sm:$0xff] %v1985
                  %v1987 = vld [vmem:[%s1923 + $0xf8] sm:$0xff]
                  %1988 = vst [vmem:[%s1924 + $0xf8] sm:$0xff] %v1987
                  %v1989 = vld [vmem:[%s1923 + $0x100] sm:$0xff]
                  %1990 = vst [vmem:[%s1924 + $0x100] sm:$0xff] %v1989
                  %v1991 = vld [vmem:[%s1923 + $0x108] sm:$0xff]
                  %1992 = vst [vmem:[%s1924 + $0x108] sm:$0xff] %v1991
                  %v1993 = vld [vmem:[%s1923 + $0x110] sm:$0xff]
                  %1994 = vst [vmem:[%s1924 + $0x110] sm:$0xff] %v1993
                  %v1995 = vld [vmem:[%s1923 + $0x118] sm:$0xff]
                  %1996 = vst [vmem:[%s1924 + $0x118] sm:$0xff] %v1995
                  %v1997 = vld [vmem:[%s1923 + $0x120] sm:$0xff]
                  %1998 = vst [vmem:[%s1924 + $0x120] sm:$0xff] %v1997
                  %v1999 = vld [vmem:[%s1923 + $0x128] sm:$0xff]
                  %2000 = vst [vmem:[%s1924 + $0x128] sm:$0xff] %v1999
                  %v2001 = vld [vmem:[%s1923 + $0x130] sm:$0xff]
                  %2002 = vst [vmem:[%s1924 + $0x130] sm:$0xff] %v2001
                  %v2003 = vld [vmem:[%s1923 + $0x138] sm:$0xff]
                  %2004 = vst [vmem:[%s1924 + $0x138] sm:$0xff] %v2003
                  %v2005 = vld [vmem:[%s1923 + $0x140] sm:$0xff]
                  %2006 = vst [vmem:[%s1924 + $0x140] sm:$0xff] %v2005
                  %v2007 = vld [vmem:[%s1923 + $0x148] sm:$0xff]
                  %2008 = vst [vmem:[%s1924 + $0x148] sm:$0xff] %v2007
                  %v2009 = vld [vmem:[%s1923 + $0x150] sm:$0xff]
                  %2010 = vst [vmem:[%s1924 + $0x150] sm:$0xff] %v2009
                  %v2011 = vld [vmem:[%s1923 + $0x158] sm:$0xff]
                  %2012 = vst [vmem:[%s1924 + $0x158] sm:$0xff] %v2011
                  %v2013 = vld [vmem:[%s1923 + $0x160] sm:$0xff]
                  %2014 = vst [vmem:[%s1924 + $0x160] sm:$0xff] %v2013
                  %v2015 = vld [vmem:[%s1923 + $0x168] sm:$0xff]
                  %2016 = vst [vmem:[%s1924 + $0x168] sm:$0xff] %v2015
                  %v2017 = vld [vmem:[%s1923 + $0x170] sm:$0xff]
                  %2018 = vst [vmem:[%s1924 + $0x170] sm:$0xff] %v2017
                  %v2019 = vld [vmem:[%s1923 + $0x178] sm:$0xff]
                  %2020 = vst [vmem:[%s1924 + $0x178] sm:$0xff] %v2019
                  %v2021 = vld [vmem:[%s1923 + $0x180] sm:$0xff]
                  %2022 = vst [vmem:[%s1924 + $0x180] sm:$0xff] %v2021
                  %v2023 = vld [vmem:[%s1923 + $0x188] sm:$0xff]
                  %2024 = vst [vmem:[%s1924 + $0x188] sm:$0xff] %v2023
                  %v2025 = vld [vmem:[%s1923 + $0x190] sm:$0xff]
                  %2026 = vst [vmem:[%s1924 + $0x190] sm:$0xff] %v2025
                  %v2027 = vld [vmem:[%s1923 + $0x198] sm:$0xff]
                  %2028 = vst [vmem:[%s1924 + $0x198] sm:$0xff] %v2027
                  %v2029 = vld [vmem:[%s1923 + $0x1a0] sm:$0xff]
                  %2030 = vst [vmem:[%s1924 + $0x1a0] sm:$0xff] %v2029
                  %v2031 = vld [vmem:[%s1923 + $0x1a8] sm:$0xff]
                  %2032 = vst [vmem:[%s1924 + $0x1a8] sm:$0xff] %v2031
                  %v2033 = vld [vmem:[%s1923 + $0x1b0] sm:$0xff]
                  %2034 = vst [vmem:[%s1924 + $0x1b0] sm:$0xff] %v2033
                  %v2035 = vld [vmem:[%s1923 + $0x1b8] sm:$0xff]
                  %2036 = vst [vmem:[%s1924 + $0x1b8] sm:$0xff] %v2035
                  %v2037 = vld [vmem:[%s1923 + $0x1c0] sm:$0xff]
                  %2038 = vst [vmem:[%s1924 + $0x1c0] sm:$0xff] %v2037
                  %v2039 = vld [vmem:[%s1923 + $0x1c8] sm:$0xff]
                  %2040 = vst [vmem:[%s1924 + $0x1c8] sm:$0xff] %v2039
                  %v2041 = vld [vmem:[%s1923 + $0x1d0] sm:$0xff]
                  %2042 = vst [vmem:[%s1924 + $0x1d0] sm:$0xff] %v2041
                  %v2043 = vld [vmem:[%s1923 + $0x1d8] sm:$0xff]
                  %2044 = vst [vmem:[%s1924 + $0x1d8] sm:$0xff] %v2043
                  %v2045 = vld [vmem:[%s1923 + $0x1e0] sm:$0xff]
                  %2046 = vst [vmem:[%s1924 + $0x1e0] sm:$0xff] %v2045
                  %v2047 = vld [vmem:[%s1923 + $0x1e8] sm:$0xff]
                  %2048 = vst [vmem:[%s1924 + $0x1e8] sm:$0xff] %v2047
                  %v2049 = vld [vmem:[%s1923 + $0x1f0] sm:$0xff]
                  %2050 = vst [vmem:[%s1924 + $0x1f0] sm:$0xff] %v2049
                  %v2051 = vld [vmem:[%s1923 + $0x1f8] sm:$0xff]
                  %2052 = vst [vmem:[%s1924 + $0x1f8] sm:$0xff] %v2051
                  %s2053 = sadd.s32 1, %s1922
                  %p2054 = scmp.ge.s32.totalorder %s2053, %s1915
                  %s2055 = scalar_select %p2054, 0, %s2053
                  %s2056 = smul.u32 %s2055, 512
                  %s2057 = smul.u32 %s2055, 512
                  %s2058 = scalar_lea.vmem %s1722, %s2056 [#allocation2]
                  %s2059 = scalar_lea.vmem %s1733, %s2057
                $region87: #{tpu_custom_call.1} parent=81 // loop_footer
                  %s1919 = sadd.s32 %s1917, 1
                $region88: #{tpu_custom_call.1} parent=81 // loop_footer_branch
                  %1916 = sbr.rel target = $region84
                $region89: #{tpu_custom_call.1} parent=81 // loop_exit
                  _
                %s2060 = sshrl.u32 %s1729, 6
                %s2061 = sand.u32 %s1729, 63
                %s2062 = smul.u32 %s2060, 64
                %s2063 = smul.u32 8, %s2062
                %s2064 = scalar_lea.vmem %s1722, %s2063 [#allocation2]
                %s2065 = smul.u32 8, %s2062
                %s2066 = scalar_lea.vmem %s1733, %s2065
                // While loop
                $region90: #{tpu_custom_call.1} parent=81 // loop_pre_header
                  _
                $region91: #{tpu_custom_call.1} parent=81 // loop_header
                  %s2068 = sphi 0, %s2070
                  %p2069 = scmp.ge.s32.totalorder %s2068, %s2061
                  %s2073 = sphi 0, %s2080
                  %s2074 = sphi %s2064, %s2083
                  %s2075 = sphi %s2066, %s2084
                $region92: #{tpu_custom_call.1} parent=81 // loop_header_branch
                  %2072 = sbr.rel (%p2069) target = $region96
                $region93: #{tpu_custom_call.1} parent=81 // loop_body
                  %v2076 = vld [vmem:[%s2074] sm:$0xff]
                  %2077 = vst [vmem:[%s2075] sm:$0xff] %v2076
                  %s2078 = sadd.s32 1, %s2073
                  %p2079 = scmp.ge.s32.totalorder %s2078, %s2061
                  %s2080 = scalar_select %p2079, 0, %s2078
                  %s2081 = smul.u32 %s2080, 8
                  %s2082 = smul.u32 %s2080, 8
                  %s2083 = scalar_lea.vmem %s2064, %s2081 [#allocation2]
                  %s2084 = scalar_lea.vmem %s2066, %s2082
                $region94: #{tpu_custom_call.1} parent=81 // loop_footer
                  %s2070 = sadd.s32 %s2068, 1
                $region95: #{tpu_custom_call.1} parent=81 // loop_footer_branch
                  %2067 = sbr.rel target = $region91
                $region96: #{tpu_custom_call.1} parent=81 // loop_exit
                  _
              $region82: #{tpu_custom_call.1} parent=59 // pred_fallthru
                _
              // Predicated region
              $region97: #{tpu_custom_call.1} parent=59 // pred_check
                _
              $region98: #{tpu_custom_call.1} parent=59 // pred_check_branch
                %2086 = sbr.rel target = $region100
              $region99: #{tpu_custom_call.1} parent=59 // pred_region
                _
              $region100: #{tpu_custom_call.1} parent=59 // pred_fallthru
                _
            $region60: #{tpu_custom_call.1} parent=55 // pred_fallthru
              _
            // Predicated region
            $region61: #{tpu_custom_call.1} parent=55 // pred_check
              _
            $region62: #{tpu_custom_call.1} parent=55 // pred_check_branch
              %1740 = sbr.rel target = $region64
            $region63: #{tpu_custom_call.1} parent=55 // pred_region
              %s1742 = ssub.s32 256, 1
              %s1743 = sshrl.u32 %s1729, 6
              // While loop
              $region65: #{tpu_custom_call.1} parent=63 // loop_pre_header
                _
              $region66: #{tpu_custom_call.1} parent=63 // loop_header
                %s1745 = sphi 0, %s1747
                %p1746 = scmp.ge.s32.totalorder %s1745, %s1743
                %s1750 = sphi 0, %s1883
                %s1751 = sphi %s1722, %s1886
                %s1752 = sphi %s1733, %s1887
              $region67: #{tpu_custom_call.1} parent=63 // loop_header_branch
                %1749 = sbr.rel (%p1746) target = $region71
              $region68: #{tpu_custom_call.1} parent=63 // loop_body
                %v1753 = vld [vmem:[%s1751] sm:%s1742]
                %1754 = vst [vmem:[%s1752] sm:%s1742] %v1753
                %v1755 = vld [vmem:[%s1751 + $0x8] sm:%s1742]
                %1756 = vst [vmem:[%s1752 + $0x8] sm:%s1742] %v1755
                %v1757 = vld [vmem:[%s1751 + $0x10] sm:%s1742]
                %1758 = vst [vmem:[%s1752 + $0x10] sm:%s1742] %v1757
                %v1759 = vld [vmem:[%s1751 + $0x18] sm:%s1742]
                %1760 = vst [vmem:[%s1752 + $0x18] sm:%s1742] %v1759
                %v1761 = vld [vmem:[%s1751 + $0x20] sm:%s1742]
                %1762 = vst [vmem:[%s1752 + $0x20] sm:%s1742] %v1761
                %v1763 = vld [vmem:[%s1751 + $0x28] sm:%s1742]
                %1764 = vst [vmem:[%s1752 + $0x28] sm:%s1742] %v1763
                %v1765 = vld [vmem:[%s1751 + $0x30] sm:%s1742]
                %1766 = vst [vmem:[%s1752 + $0x30] sm:%s1742] %v1765
                %v1767 = vld [vmem:[%s1751 + $0x38] sm:%s1742]
                %1768 = vst [vmem:[%s1752 + $0x38] sm:%s1742] %v1767
                %v1769 = vld [vmem:[%s1751 + $0x40] sm:%s1742]
                %1770 = vst [vmem:[%s1752 + $0x40] sm:%s1742] %v1769
                %v1771 = vld [vmem:[%s1751 + $0x48] sm:%s1742]
                %1772 = vst [vmem:[%s1752 + $0x48] sm:%s1742] %v1771
                %v1773 = vld [vmem:[%s1751 + $0x50] sm:%s1742]
                %1774 = vst [vmem:[%s1752 + $0x50] sm:%s1742] %v1773
                %v1775 = vld [vmem:[%s1751 + $0x58] sm:%s1742]
                %1776 = vst [vmem:[%s1752 + $0x58] sm:%s1742] %v1775
                %v1777 = vld [vmem:[%s1751 + $0x60] sm:%s1742]
                %1778 = vst [vmem:[%s1752 + $0x60] sm:%s1742] %v1777
                %v1779 = vld [vmem:[%s1751 + $0x68] sm:%s1742]
                %1780 = vst [vmem:[%s1752 + $0x68] sm:%s1742] %v1779
                %v1781 = vld [vmem:[%s1751 + $0x70] sm:%s1742]
                %1782 = vst [vmem:[%s1752 + $0x70] sm:%s1742] %v1781
                %v1783 = vld [vmem:[%s1751 + $0x78] sm:%s1742]
                %1784 = vst [vmem:[%s1752 + $0x78] sm:%s1742] %v1783
                %v1785 = vld [vmem:[%s1751 + $0x80] sm:%s1742]
                %1786 = vst [vmem:[%s1752 + $0x80] sm:%s1742] %v1785
                %v1787 = vld [vmem:[%s1751 + $0x88] sm:%s1742]
                %1788 = vst [vmem:[%s1752 + $0x88] sm:%s1742] %v1787
                %v1789 = vld [vmem:[%s1751 + $0x90] sm:%s1742]
                %1790 = vst [vmem:[%s1752 + $0x90] sm:%s1742] %v1789
                %v1791 = vld [vmem:[%s1751 + $0x98] sm:%s1742]
                %1792 = vst [vmem:[%s1752 + $0x98] sm:%s1742] %v1791
                %v1793 = vld [vmem:[%s1751 + $0xa0] sm:%s1742]
                %1794 = vst [vmem:[%s1752 + $0xa0] sm:%s1742] %v1793
                %v1795 = vld [vmem:[%s1751 + $0xa8] sm:%s1742]
                %1796 = vst [vmem:[%s1752 + $0xa8] sm:%s1742] %v1795
                %v1797 = vld [vmem:[%s1751 + $0xb0] sm:%s1742]
                %1798 = vst [vmem:[%s1752 + $0xb0] sm:%s1742] %v1797
                %v1799 = vld [vmem:[%s1751 + $0xb8] sm:%s1742]
                %1800 = vst [vmem:[%s1752 + $0xb8] sm:%s1742] %v1799
                %v1801 = vld [vmem:[%s1751 + $0xc0] sm:%s1742]
                %1802 = vst [vmem:[%s1752 + $0xc0] sm:%s1742] %v1801
                %v1803 = vld [vmem:[%s1751 + $0xc8] sm:%s1742]
                %1804 = vst [vmem:[%s1752 + $0xc8] sm:%s1742] %v1803
                %v1805 = vld [vmem:[%s1751 + $0xd0] sm:%s1742]
                %1806 = vst [vmem:[%s1752 + $0xd0] sm:%s1742] %v1805
                %v1807 = vld [vmem:[%s1751 + $0xd8] sm:%s1742]
                %1808 = vst [vmem:[%s1752 + $0xd8] sm:%s1742] %v1807
                %v1809 = vld [vmem:[%s1751 + $0xe0] sm:%s1742]
                %1810 = vst [vmem:[%s1752 + $0xe0] sm:%s1742] %v1809
                %v1811 = vld [vmem:[%s1751 + $0xe8] sm:%s1742]
                %1812 = vst [vmem:[%s1752 + $0xe8] sm:%s1742] %v1811
                %v1813 = vld [vmem:[%s1751 + $0xf0] sm:%s1742]
                %1814 = vst [vmem:[%s1752 + $0xf0] sm:%s1742] %v1813
                %v1815 = vld [vmem:[%s1751 + $0xf8] sm:%s1742]
                %1816 = vst [vmem:[%s1752 + $0xf8] sm:%s1742] %v1815
                %v1817 = vld [vmem:[%s1751 + $0x100] sm:%s1742]
                %1818 = vst [vmem:[%s1752 + $0x100] sm:%s1742] %v1817
                %v1819 = vld [vmem:[%s1751 + $0x108] sm:%s1742]
                %1820 = vst [vmem:[%s1752 + $0x108] sm:%s1742] %v1819
                %v1821 = vld [vmem:[%s1751 + $0x110] sm:%s1742]
                %1822 = vst [vmem:[%s1752 + $0x110] sm:%s1742] %v1821
                %v1823 = vld [vmem:[%s1751 + $0x118] sm:%s1742]
                %1824 = vst [vmem:[%s1752 + $0x118] sm:%s1742] %v1823
                %v1825 = vld [vmem:[%s1751 + $0x120] sm:%s1742]
                %1826 = vst [vmem:[%s1752 + $0x120] sm:%s1742] %v1825
                %v1827 = vld [vmem:[%s1751 + $0x128] sm:%s1742]
                %1828 = vst [vmem:[%s1752 + $0x128] sm:%s1742] %v1827
                %v1829 = vld [vmem:[%s1751 + $0x130] sm:%s1742]
                %1830 = vst [vmem:[%s1752 + $0x130] sm:%s1742] %v1829
                %v1831 = vld [vmem:[%s1751 + $0x138] sm:%s1742]
                %1832 = vst [vmem:[%s1752 + $0x138] sm:%s1742] %v1831
                %v1833 = vld [vmem:[%s1751 + $0x140] sm:%s1742]
                %1834 = vst [vmem:[%s1752 + $0x140] sm:%s1742] %v1833
                %v1835 = vld [vmem:[%s1751 + $0x148] sm:%s1742]
                %1836 = vst [vmem:[%s1752 + $0x148] sm:%s1742] %v1835
                %v1837 = vld [vmem:[%s1751 + $0x150] sm:%s1742]
                %1838 = vst [vmem:[%s1752 + $0x150] sm:%s1742] %v1837
                %v1839 = vld [vmem:[%s1751 + $0x158] sm:%s1742]
                %1840 = vst [vmem:[%s1752 + $0x158] sm:%s1742] %v1839
                %v1841 = vld [vmem:[%s1751 + $0x160] sm:%s1742]
                %1842 = vst [vmem:[%s1752 + $0x160] sm:%s1742] %v1841
                %v1843 = vld [vmem:[%s1751 + $0x168] sm:%s1742]
                %1844 = vst [vmem:[%s1752 + $0x168] sm:%s1742] %v1843
                %v1845 = vld [vmem:[%s1751 + $0x170] sm:%s1742]
                %1846 = vst [vmem:[%s1752 + $0x170] sm:%s1742] %v1845
                %v1847 = vld [vmem:[%s1751 + $0x178] sm:%s1742]
                %1848 = vst [vmem:[%s1752 + $0x178] sm:%s1742] %v1847
                %v1849 = vld [vmem:[%s1751 + $0x180] sm:%s1742]
                %1850 = vst [vmem:[%s1752 + $0x180] sm:%s1742] %v1849
                %v1851 = vld [vmem:[%s1751 + $0x188] sm:%s1742]
                %1852 = vst [vmem:[%s1752 + $0x188] sm:%s1742] %v1851
                %v1853 = vld [vmem:[%s1751 + $0x190] sm:%s1742]
                %1854 = vst [vmem:[%s1752 + $0x190] sm:%s1742] %v1853
                %v1855 = vld [vmem:[%s1751 + $0x198] sm:%s1742]
                %1856 = vst [vmem:[%s1752 + $0x198] sm:%s1742] %v1855
                %v1857 = vld [vmem:[%s1751 + $0x1a0] sm:%s1742]
                %1858 = vst [vmem:[%s1752 + $0x1a0] sm:%s1742] %v1857
                %v1859 = vld [vmem:[%s1751 + $0x1a8] sm:%s1742]
                %1860 = vst [vmem:[%s1752 + $0x1a8] sm:%s1742] %v1859
                %v1861 = vld [vmem:[%s1751 + $0x1b0] sm:%s1742]
                %1862 = vst [vmem:[%s1752 + $0x1b0] sm:%s1742] %v1861
                %v1863 = vld [vmem:[%s1751 + $0x1b8] sm:%s1742]
                %1864 = vst [vmem:[%s1752 + $0x1b8] sm:%s1742] %v1863
                %v1865 = vld [vmem:[%s1751 + $0x1c0] sm:%s1742]
                %1866 = vst [vmem:[%s1752 + $0x1c0] sm:%s1742] %v1865
                %v1867 = vld [vmem:[%s1751 + $0x1c8] sm:%s1742]
                %1868 = vst [vmem:[%s1752 + $0x1c8] sm:%s1742] %v1867
                %v1869 = vld [vmem:[%s1751 + $0x1d0] sm:%s1742]
                %1870 = vst [vmem:[%s1752 + $0x1d0] sm:%s1742] %v1869
                %v1871 = vld [vmem:[%s1751 + $0x1d8] sm:%s1742]
                %1872 = vst [vmem:[%s1752 + $0x1d8] sm:%s1742] %v1871
                %v1873 = vld [vmem:[%s1751 + $0x1e0] sm:%s1742]
                %1874 = vst [vmem:[%s1752 + $0x1e0] sm:%s1742] %v1873
                %v1875 = vld [vmem:[%s1751 + $0x1e8] sm:%s1742]
                %1876 = vst [vmem:[%s1752 + $0x1e8] sm:%s1742] %v1875
                %v1877 = vld [vmem:[%s1751 + $0x1f0] sm:%s1742]
                %1878 = vst [vmem:[%s1752 + $0x1f0] sm:%s1742] %v1877
                %v1879 = vld [vmem:[%s1751 + $0x1f8] sm:%s1742]
                %1880 = vst [vmem:[%s1752 + $0x1f8] sm:%s1742] %v1879
                %s1881 = sadd.s32 1, %s1750
                %p1882 = scmp.ge.s32.totalorder %s1881, %s1743
                %s1883 = scalar_select %p1882, 0, %s1881
                %s1884 = smul.u32 %s1883, 512
                %s1885 = smul.u32 %s1883, 512
                %s1886 = scalar_lea.vmem %s1722, %s1884 [#allocation2]
                %s1887 = scalar_lea.vmem %s1733, %s1885
              $region69: #{tpu_custom_call.1} parent=63 // loop_footer
                %s1747 = sadd.s32 %s1745, 1
              $region70: #{tpu_custom_call.1} parent=63 // loop_footer_branch
                %1744 = sbr.rel target = $region66
              $region71: #{tpu_custom_call.1} parent=63 // loop_exit
                _
              %s1888 = sshrl.u32 %s1729, 6
              %s1889 = sand.u32 %s1729, 63
              %s1890 = smul.u32 %s1888, 64
              %s1891 = smul.u32 8, %s1890
              %s1892 = scalar_lea.vmem %s1722, %s1891 [#allocation2]
              %s1893 = smul.u32 8, %s1890
              %s1894 = scalar_lea.vmem %s1733, %s1893
              // While loop
              $region72: #{tpu_custom_call.1} parent=63 // loop_pre_header
                _
              $region73: #{tpu_custom_call.1} parent=63 // loop_header
                %s1896 = sphi 0, %s1898
                %p1897 = scmp.ge.s32.totalorder %s1896, %s1889
                %s1901 = sphi 0, %s1908
                %s1902 = sphi %s1892, %s1911
                %s1903 = sphi %s1894, %s1912
              $region74: #{tpu_custom_call.1} parent=63 // loop_header_branch
                %1900 = sbr.rel (%p1897) target = $region78
              $region75: #{tpu_custom_call.1} parent=63 // loop_body
                %v1904 = vld [vmem:[%s1902] sm:%s1742]
                %1905 = vst [vmem:[%s1903] sm:%s1742] %v1904
                %s1906 = sadd.s32 1, %s1901
                %p1907 = scmp.ge.s32.totalorder %s1906, %s1889
                %s1908 = scalar_select %p1907, 0, %s1906
                %s1909 = smul.u32 %s1908, 8
                %s1910 = smul.u32 %s1908, 8
                %s1911 = scalar_lea.vmem %s1892, %s1909 [#allocation2]
                %s1912 = scalar_lea.vmem %s1894, %s1910
              $region76: #{tpu_custom_call.1} parent=63 // loop_footer
                %s1898 = sadd.s32 %s1896, 1
              $region77: #{tpu_custom_call.1} parent=63 // loop_footer_branch
                %1895 = sbr.rel target = $region73
              $region78: #{tpu_custom_call.1} parent=63 // loop_exit
                _
            $region64: #{tpu_custom_call.1} parent=55 // pred_fallthru
              _
          $region56: #{tpu_custom_call.1} parent=51 // pred_fallthru
            _
          %2087 = vnop
        $region52: #{tpu_custom_call.1} parent=47 // pred_fallthru
          _
      $region48: #{tpu_custom_call.1} parent=5 // pred_fallthru
        _
      %p2088 = scmp.le.s32.totalorder 2, %s13
      // Predicated region
      $region101: #{tpu_custom_call.1} parent=5 // pred_check
        %p2089 = pneg %p2088
      $region102: #{tpu_custom_call.1} parent=5 // pred_check_branch
        %2091 = sbr.rel (%p2089) target = $region104
      $region103: #{tpu_custom_call.1} parent=5 // pred_region
        %s2092 = ssub.s32 %s13, 2
        // Predicated region
        $region105: #{tpu_custom_call.1} parent=103 // pred_check
          %p2093 = pneg %p194
        $region106: #{tpu_custom_call.1} parent=103 // pred_check_branch
          %2095 = sbr.rel (%p2093) target = $region108
        $region107: #{tpu_custom_call.1} parent=103 // pred_region
          %s2096 = sand.u32 %s179, 1
          %s2097 = sand.u32 %s179, 1
          %s2098 = smul.addr %s2097, 512
          %s2099 = scalar_lea.vmem [#allocation2], %s2098
        $region108: #{tpu_custom_call.1} parent=103 // pred_fallthru
          _
      $region104: #{tpu_custom_call.1} parent=5 // pred_fallthru
        _
    $region6: #{tpu_custom_call.1} parent=1 // loop_footer
      %s17 = sadd.s32 1, %s13
    $region7: #{tpu_custom_call.1} parent=1 // loop_footer_branch
      %12 = sbr.rel target = $region3
    $region8: #{tpu_custom_call.1} parent=1 // loop_exit
      _

</llo_original>
